<compile_context>
chip_gen: v5e
topology: v5e:2x2
jax: 0.10.0
libtpu: 0.0.40
codegen_flags: <defaults>
</compile_context>

<pallas_src>
import functools
import math

import jax
import jax.numpy as jnp
from jax.experimental import pallas as pl
from jax.experimental.pallas import tpu as pltpu


def _mha_kernel(*refs, num_heads, head_dim, ln_eps, has_mask):
    """One grid step == one batch element. Fully fused MHA block."""
    if has_mask:
        (xa_ref, xb_ref, mask_ref,
         wq_ref, bq_ref, wk_ref, bk_ref, wv_ref, bv_ref,
         wo_ref, bo_ref, gamma_ref, beta_ref, out_ref) = refs
    else:
        mask_ref = None
        (xa_ref, xb_ref,
         wq_ref, bq_ref, wk_ref, bk_ref, wv_ref, bv_ref,
         wo_ref, bo_ref, gamma_ref, beta_ref, out_ref) = refs

    xa = xa_ref[0]                                  # (Sa, Hd) f32
    xb = xb_ref[0]                                  # (Sb, Hd) f32
    Sa, Hd = xa.shape

    xa_bf = xa.astype(jnp.bfloat16)
    xb_bf = xb.astype(jnp.bfloat16)

    # QKV projections: bf16 operands, f32 MXU accumulation, f32 bias add.
    q = jnp.dot(xa_bf, wq_ref[...], preferred_element_type=jnp.float32) + bq_ref[...]
    k = jnp.dot(xb_bf, wk_ref[...], preferred_element_type=jnp.float32) + bk_ref[...]
    v = jnp.dot(xb_bf, wv_ref[...], preferred_element_type=jnp.float32) + bv_ref[...]

    # Fold 1/sqrt(head_dim) into q once (Sa*Hd elements instead of Sa*Sb*nH).
    q = q * (1.0 / math.sqrt(head_dim))

    q_bf = q.astype(jnp.bfloat16)
    k_bf = k.astype(jnp.bfloat16)
    v_bf = v.astype(jnp.bfloat16)
    wo = wo_ref[...]                                # (Hd, Hd) bf16

    if mask_ref is not None:
        mask = mask_ref[0]                          # (Sa, Sb) additive, f32

    # Contract the LAST dim of both operands (no transpose of k).
    contract_last = (((1,), (1,)), ((), ()))

    # Per-head attention; head concat folded into the output projection by
    # accumulating  ctx_h @ Wo[h*D:(h+1)*D, :]  into a full-width accumulator.
    acc = jnp.zeros((Sa, Hd), jnp.float32)
    for h in range(num_heads):                      # static unroll (nH small)
        lo = h * head_dim
        hi = lo + head_dim
        qh = q_bf[:, lo:hi]                         # (Sa, D) bf16
        kh = k_bf[:, lo:hi]                         # (Sb, D) bf16
        vh = v_bf[:, lo:hi]                         # (Sb, D) bf16

        s = jax.lax.dot_general(qh, kh, contract_last,
                                preferred_element_type=jnp.float32)  # (Sa, Sb)
        if mask_ref is not None:
            s = s + mask
        s = s - jnp.max(s, axis=-1, keepdims=True)
        p = jnp.exp(s)
        p = p * pl.reciprocal(jnp.sum(p, axis=-1, keepdims=True), approx=True)
        # TODO(synk): attention-prob dropout / head_mask omitted (eval-mode
        # identity; forward uses head_mask=None).

        ctx_h = jnp.dot(p.astype(jnp.bfloat16), vh,
                        preferred_element_type=jnp.float32)          # (Sa, D)
        acc = acc + jnp.dot(ctx_h.astype(jnp.bfloat16), wo[lo:hi, :],
                            preferred_element_type=jnp.float32)      # (Sa, Hd)

    # Output bias + residual + LayerNorm, all f32 (output dropout = identity).
    resid = xa + acc + bo_ref[...]
    mu = jnp.mean(resid, axis=-1, keepdims=True)
    var = jnp.mean(jnp.square(resid - mu), axis=-1, keepdims=True)
    y = (resid - mu) * jax.lax.rsqrt(var + ln_eps)
    out_ref[0] = (y * gamma_ref[...] + beta_ref[...]).astype(out_ref.dtype)


def prepare_mha_params(params):
    """One-time prep (hoisted out of the forward): pre-transpose nn.Linear
    weights (out,in)->(in,out) so the kernel runs lane-dense x@W, and cast
    them to bf16 for native MXU throughput. Biases / LN params stay f32."""
    f32 = jnp.float32
    bf16 = jnp.bfloat16
    return {
        "wq": jnp.asarray(params["q_w"]).T.astype(bf16),
        "wk": jnp.asarray(params["k_w"]).T.astype(bf16),
        "wv": jnp.asarray(params["v_w"]).T.astype(bf16),
        "wo": jnp.asarray(params["dense_w"]).T.astype(bf16),
        "bq": jnp.asarray(params["q_b"], f32)[None, :],
        "bk": jnp.asarray(params["k_b"], f32)[None, :],
        "bv": jnp.asarray(params["v_b"], f32)[None, :],
        "bo": jnp.asarray(params["dense_b"], f32)[None, :],
        "gamma": jnp.asarray(params["ln_w"], f32)[None, :],
        "beta": jnp.asarray(params["ln_b"], f32)[None, :],
    }


def mha_forward(prepared, input_ids_a, input_ids_b, attention_mask=None,
                *, num_heads, ln_eps=1e-12):
    B, Sa, Hd = input_ids_a.shape
    Sb = input_ids_b.shape[1]
    assert Hd % num_heads == 0
    head_dim = Hd // num_heads
    has_mask = attention_mask is not None

    operands = [input_ids_a, input_ids_b]
    in_specs = [
        pl.BlockSpec((1, Sa, Hd), lambda b: (b, 0, 0)),   # input_ids_a
        pl.BlockSpec((1, Sb, Hd), lambda b: (b, 0, 0)),   # input_ids_b
    ]

    if has_mask:
        # Normalize BERT-style masks ((B,1,1,Sb) / (B,1,Sb) / (Sa,Sb) / ...)
        # but keep the batch dim UNbroadcast (1 or B) so no redundant HBM DMA.
        mask = jnp.asarray(attention_mask, jnp.float32)
        if mask.ndim == 4:                 # (B_or_1, 1, Sa_or_1, Sb)
            mask = mask[:, 0]
        if mask.ndim == 2:                 # (Sa_or_1, Sb)
            mask = mask[None]
        Bm = mask.shape[0]
        mask = jnp.broadcast_to(mask, (Bm, Sa, Sb))       # seq dims only
        operands.append(mask)
        if Bm == 1:
            in_specs.append(pl.BlockSpec((1, Sa, Sb), lambda b: (0, 0, 0)))
        else:
            in_specs.append(pl.BlockSpec((1, Sa, Sb), lambda b: (b, 0, 0)))

    full = lambda b: (0, 0)                # replicated weights / biases / LN
    operands += [prepared["wq"], prepared["bq"], prepared["wk"], prepared["bk"],
                 prepared["wv"], prepared["bv"], prepared["wo"], prepared["bo"],
                 prepared["gamma"], prepared["beta"]]
    in_specs += [
        pl.BlockSpec((Hd, Hd), full), pl.BlockSpec((1, Hd), full),   # Wq, bq
        pl.BlockSpec((Hd, Hd), full), pl.BlockSpec((1, Hd), full),   # Wk, bk
        pl.BlockSpec((Hd, Hd), full), pl.BlockSpec((1, Hd), full),   # Wv, bv
        pl.BlockSpec((Hd, Hd), full), pl.BlockSpec((1, Hd), full),   # Wo, bo
        pl.BlockSpec((1, Hd), full), pl.BlockSpec((1, Hd), full),    # gamma, beta
    ]

    # Rough per-step VMEM estimate; only override the scoped default when the
    # working set actually needs it (production sizes), capped below physical.
    est_bytes = (
        2 * 4 * (2 * Sa * Hd + Sb * Hd)                    # pipelined f32 act blocks (in+out)
        + (2 * 4 * Sa * Sb if has_mask else 0)             # pipelined mask block
        + 2 * 2 * 4 * Hd * Hd                              # double-buffered bf16 weights
        + 4 * ((Sa + 2 * Sb) * Hd * 2 + 2 * Sa * Sb + 2 * Sa * Hd)  # in-kernel temps
    )
    compiler_kwargs = dict(dimension_semantics=("parallel",))  # batch -> megacore
    if est_bytes > 16 * 1024 * 1024:
        compiler_kwargs["vmem_limit_bytes"] = min(int(est_bytes * 3 // 2),
                                                  60 * 1024 * 1024)

    kernel = functools.partial(_mha_kernel, num_heads=num_heads,
                               head_dim=head_dim, ln_eps=ln_eps,
                               has_mask=has_mask)

    out = pl.pallas_call(
        kernel,
        out_shape=jax.ShapeDtypeStruct((B, Sa, Hd), jnp.float32),
        grid=(B,),
        in_specs=in_specs,
        out_specs=pl.BlockSpec((1, Sa, Hd), lambda b: (b, 0, 0)),
        compiler_params=pltpu.CompilerParams(**compiler_kwargs),
    )(*operands)
    return out


def _reference(params, xa, xb, attention_mask, num_heads, ln_eps):
    """Pure-JAX f32 reference mirroring the PyTorch MHA.forward (eval mode)."""
    B, Sa, Hd = xa.shape
    Sb = xb.shape[1]
    D = Hd // num_heads

    q = xa @ params["q_w"].T + params["q_b"]
    k = xb @ params["k_w"].T + params["k_b"]
    v = xb @ params["v_w"].T + params["v_b"]

    def split(x, S):
        return x.reshape(B, S, num_heads, D).transpose(0, 2, 1, 3)

    qh, kh, vh = split(q, Sa), split(k, Sb), split(v, Sb)
    scores = jnp.einsum("bhqd,bhkd->bhqk", qh, kh) / math.sqrt(D)
    if attention_mask is not None:
        scores = scores + attention_mask
    probs = jax.nn.softmax(scores, axis=-1)
    ctx = jnp.einsum("bhqk,bhkd->bhqd", probs, vh)
    ctx = ctx.transpose(0, 2, 1, 3).reshape(B, Sa, Hd)
    proj = ctx @ params["dense_w"].T + params["dense_b"]
    h = xa + proj
    mu = h.mean(-1, keepdims=True)
    var = ((h - mu) ** 2).mean(-1, keepdims=True)
    y = (h - mu) / jnp.sqrt(var + ln_eps)
    return y * params["ln_w"] + params["ln_b"]


if __name__ == "__main__":
    # Small shapes consistent with the module: batch=2, seq=8, hidden=32, heads=4.
    B, Sa, Sb, Hd, nH = 2, 8, 8, 32, 4
    ln_eps = 1e-12

    key = jax.random.PRNGKey(0)
    ks = jax.random.split(key, 12)

    params = {
        "q_w": jax.random.normal(ks[0], (Hd, Hd), jnp.float32) * 0.1,
        "q_b": jax.random.normal(ks[1], (Hd,), jnp.float32) * 0.1,
        "k_w": jax.random.normal(ks[2], (Hd, Hd), jnp.float32) * 0.1,
        "k_b": jax.random.normal(ks[3], (Hd,), jnp.float32) * 0.1,
        "v_w": jax.random.normal(ks[4], (Hd, Hd), jnp.float32) * 0.1,
        "v_b": jax.random.normal(ks[5], (Hd,), jnp.float32) * 0.1,
        "dense_w": jax.random.normal(ks[6], (Hd, Hd), jnp.float32) * 0.1,
        "dense_b": jax.random.normal(ks[7], (Hd,), jnp.float32) * 0.1,
        "ln_w": 1.0 + 0.1 * jax.random.normal(ks[8], (Hd,), jnp.float32),
        "ln_b": 0.1 * jax.random.normal(ks[9], (Hd,), jnp.float32),
    }

    input_ids_a = jax.random.normal(ks[10], (B, Sa, Hd), jnp.float32)
    input_ids_b = jax.random.normal(ks[11], (B, Sb, Hd), jnp.float32)

    prepared = prepare_mha_params(params)   # one-time weight transpose + bf16 cast

    # Tolerance widened vs the pure-f32 version: matmuls now run with bf16
    # operands (f32 accumulation), which is normal mixed-precision error.
    TOL = 5e-2

    # --- path 1: no attention mask (mask-free kernel variant) ---------------
    out = mha_forward(prepared, input_ids_a, input_ids_b, None,
                      num_heads=nH, ln_eps=ln_eps)
    out = jax.block_until_ready(out)
    ref = _reference(params, input_ids_a, input_ids_b, None, nH, ln_eps)
    assert out.shape == (B, Sa, Hd)
    assert jnp.allclose(out, ref, atol=TOL, rtol=TOL), \
        float(jnp.max(jnp.abs(out - ref)))

    # --- path 2: BERT-style additive mask (shared across batch & heads) -----
    mask4 = jnp.zeros((1, 1, 1, Sb), jnp.float32).at[..., Sb - 2:].set(-1e9)
    out_m = mha_forward(prepared, input_ids_a, input_ids_b, mask4,
                        num_heads=nH, ln_eps=ln_eps)
    out_m = jax.block_until_ready(out_m)
    ref_m = _reference(params, input_ids_a, input_ids_b, mask4, nH, ln_eps)
    assert jnp.allclose(out_m, ref_m, atol=TOL, rtol=TOL), \
        float(jnp.max(jnp.abs(out_m - ref_m)))

    print("KERNEL_OK")
</pallas_src>

<mosaic_0001>
module attributes {stable_mosaic.version = 11 : i64} {
  func.func @_mha_kernel(%arg0: i32, %arg1: memref<1x8x32xf32, #tpu.memory_space<vmem>>, %arg2: memref<1x8x32xf32, #tpu.memory_space<vmem>>, %arg3: memref<32x32xbf16, #tpu.memory_space<vmem>>, %arg4: memref<1x32xf32, #tpu.memory_space<vmem>>, %arg5: memref<32x32xbf16, #tpu.memory_space<vmem>>, %arg6: memref<1x32xf32, #tpu.memory_space<vmem>>, %arg7: memref<32x32xbf16, #tpu.memory_space<vmem>>, %arg8: memref<1x32xf32, #tpu.memory_space<vmem>>, %arg9: memref<32x32xbf16, #tpu.memory_space<vmem>>, %arg10: memref<1x32xf32, #tpu.memory_space<vmem>>, %arg11: memref<1x32xf32, #tpu.memory_space<vmem>>, %arg12: memref<1x32xf32, #tpu.memory_space<vmem>>, %arg13: memref<1x8x32xf32, #tpu.memory_space<vmem>>) attributes {dimension_semantics = [#tpu.dimension_semantics<parallel>], iteration_bounds = array<i64: 2>, scalar_prefetch = 0 : i64, scratch_operands = 0 : i64, tpu.core_type = #tpu.core_type<tc>, window_params = [{transform_indices = @transform_0, window_bounds = array<i64: 1, 8, 32>}, {transform_indices = @transform_1, window_bounds = array<i64: 1, 8, 32>}, {pipeline_mode = #tpu.pipeline_mode<synchronous>, transform_indices = @transform_2, window_bounds = array<i64: 32, 32>}, {pipeline_mode = #tpu.pipeline_mode<synchronous>, transform_indices = @transform_3, window_bounds = array<i64: 1, 32>}, {pipeline_mode = #tpu.pipeline_mode<synchronous>, transform_indices = @transform_4, window_bounds = array<i64: 32, 32>}, {pipeline_mode = #tpu.pipeline_mode<synchronous>, transform_indices = @transform_5, window_bounds = array<i64: 1, 32>}, {pipeline_mode = #tpu.pipeline_mode<synchronous>, transform_indices = @transform_6, window_bounds = array<i64: 32, 32>}, {pipeline_mode = #tpu.pipeline_mode<synchronous>, transform_indices = @transform_7, window_bounds = array<i64: 1, 32>}, {pipeline_mode = #tpu.pipeline_mode<synchronous>, transform_indices = @transform_8, window_bounds = array<i64: 32, 32>}, {pipeline_mode = #tpu.pipeline_mode<synchronous>, transform_indices = @transform_9, window_bounds = array<i64: 1, 32>}, {pipeline_mode = #tpu.pipeline_mode<synchronous>, transform_indices = @transform_10, window_bounds = array<i64: 1, 32>}, {pipeline_mode = #tpu.pipeline_mode<synchronous>, transform_indices = @transform_11, window_bounds = array<i64: 1, 32>}, {transform_indices = @transform_12, window_bounds = array<i64: 1, 8, 32>}]} {
    %c0 = arith.constant 0 : index
    %c0_0 = arith.constant 0 : index
    %c0_1 = arith.constant 0 : index
    %0 = vector.load %arg1[%c0, %c0_0, %c0_1] : memref<1x8x32xf32, #tpu.memory_space<vmem>>, vector<1x8x32xf32>
    %1 = vector.shape_cast %0 : vector<1x8x32xf32> to vector<8x32xf32>
    %c0_2 = arith.constant 0 : index
    %c0_3 = arith.constant 0 : index
    %c0_4 = arith.constant 0 : index
    %2 = vector.load %arg2[%c0_2, %c0_3, %c0_4] : memref<1x8x32xf32, #tpu.memory_space<vmem>>, vector<1x8x32xf32>
    %3 = vector.shape_cast %2 : vector<1x8x32xf32> to vector<8x32xf32>
    %4 = arith.truncf %1 : vector<8x32xf32> to vector<8x32xbf16>
    %5 = arith.truncf %3 : vector<8x32xf32> to vector<8x32xbf16>
    %c0_5 = arith.constant 0 : index
    %c0_6 = arith.constant 0 : index
    %6 = vector.load %arg3[%c0_5, %c0_6] : memref<32x32xbf16, #tpu.memory_space<vmem>>, vector<32x32xbf16>
    %cst = arith.constant dense<0.000000e+00> : vector<8x32xf32>
    %7 = tpu.matmul %4, %6, %cst {dimension_numbers = #tpu.dot_dimension_numbers<[1], [0], [0], [1], [0, 0, 1, 1], [], []>} : vector<8x32xbf16>, vector<32x32xbf16>, vector<8x32xf32> -> vector<8x32xf32>
    %c0_7 = arith.constant 0 : index
    %c0_8 = arith.constant 0 : index
    %8 = vector.load %arg4[%c0_7, %c0_8] : memref<1x32xf32, #tpu.memory_space<vmem>>, vector<1x32xf32>
    %9 = vector.broadcast %8 : vector<1x32xf32> to vector<8x32xf32>
    %10 = arith.addf %7, %9 : vector<8x32xf32>
    %c0_9 = arith.constant 0 : index
    %c0_10 = arith.constant 0 : index
    %11 = vector.load %arg5[%c0_9, %c0_10] : memref<32x32xbf16, #tpu.memory_space<vmem>>, vector<32x32xbf16>
    %cst_11 = arith.constant dense<0.000000e+00> : vector<8x32xf32>
    %12 = tpu.matmul %5, %11, %cst_11 {dimension_numbers = #tpu.dot_dimension_numbers<[1], [0], [0], [1], [0, 0, 1, 1], [], []>} : vector<8x32xbf16>, vector<32x32xbf16>, vector<8x32xf32> -> vector<8x32xf32>
    %c0_12 = arith.constant 0 : index
    %c0_13 = arith.constant 0 : index
    %13 = vector.load %arg6[%c0_12, %c0_13] : memref<1x32xf32, #tpu.memory_space<vmem>>, vector<1x32xf32>
    %14 = vector.broadcast %13 : vector<1x32xf32> to vector<8x32xf32>
    %15 = arith.addf %12, %14 : vector<8x32xf32>
    %c0_14 = arith.constant 0 : index
    %c0_15 = arith.constant 0 : index
    %16 = vector.load %arg7[%c0_14, %c0_15] : memref<32x32xbf16, #tpu.memory_space<vmem>>, vector<32x32xbf16>
    %cst_16 = arith.constant dense<0.000000e+00> : vector<8x32xf32>
    %17 = tpu.matmul %5, %16, %cst_16 {dimension_numbers = #tpu.dot_dimension_numbers<[1], [0], [0], [1], [0, 0, 1, 1], [], []>} : vector<8x32xbf16>, vector<32x32xbf16>, vector<8x32xf32> -> vector<8x32xf32>
    %c0_17 = arith.constant 0 : index
    %c0_18 = arith.constant 0 : index
    %18 = vector.load %arg8[%c0_17, %c0_18] : memref<1x32xf32, #tpu.memory_space<vmem>>, vector<1x32xf32>
    %19 = vector.broadcast %18 : vector<1x32xf32> to vector<8x32xf32>
    %20 = arith.addf %17, %19 : vector<8x32xf32>
    %cst_19 = arith.constant 0.353553385 : f32
    %21 = vector.broadcast %cst_19 : f32 to vector<8x32xf32>
    %22 = arith.mulf %10, %21 : vector<8x32xf32>
    %23 = arith.truncf %22 : vector<8x32xf32> to vector<8x32xbf16>
    %24 = arith.truncf %15 : vector<8x32xf32> to vector<8x32xbf16>
    %25 = arith.truncf %20 : vector<8x32xf32> to vector<8x32xbf16>
    %c0_20 = arith.constant 0 : index
    %c0_21 = arith.constant 0 : index
    %26 = vector.load %arg9[%c0_20, %c0_21] : memref<32x32xbf16, #tpu.memory_space<vmem>>, vector<32x32xbf16>
    %cst_22 = arith.constant 0.000000e+00 : f32
    %27 = vector.broadcast %cst_22 : f32 to vector<8x32xf32>
    %28 = vector.extract_strided_slice %23 {offsets = [0, 0], sizes = [8, 8], strides = [1, 1]} : vector<8x32xbf16> to vector<8x8xbf16>
    %29 = vector.extract_strided_slice %24 {offsets = [0, 0], sizes = [8, 8], strides = [1, 1]} : vector<8x32xbf16> to vector<8x8xbf16>
    %30 = vector.extract_strided_slice %25 {offsets = [0, 0], sizes = [8, 8], strides = [1, 1]} : vector<8x32xbf16> to vector<8x8xbf16>
    %cst_23 = arith.constant dense<0.000000e+00> : vector<8x8xf32>
    %31 = tpu.matmul %28, %29, %cst_23 {dimension_numbers = #tpu.dot_dimension_numbers<[1], [1], [0], [0], [0, 0, 1, 0], [], []>} : vector<8x8xbf16>, vector<8x8xbf16>, vector<8x8xf32> -> vector<8x8xf32>
    %cst_24 = arith.constant dense<0xFF800000> : vector<8xf32>
    %32 = vector.multi_reduction <maximumf>, %31, %cst_24 [1] : vector<8x8xf32> to vector<8xf32>
    %33 = vector.shape_cast %32 : vector<8xf32> to vector<8x1xf32>
    %34 = vector.broadcast %33 : vector<8x1xf32> to vector<8x8xf32>
    %35 = arith.subf %31, %34 : vector<8x8xf32>
    %36 = math.exp %35 : vector<8x8xf32>
    %cst_25 = arith.constant dense<0.000000e+00> : vector<8xf32>
    %37 = vector.multi_reduction <add>, %36, %cst_25 [1] : vector<8x8xf32> to vector<8xf32>
    %38 = vector.shape_cast %37 : vector<8xf32> to vector<8x1xf32>
    %39 = tpu.reciprocal %38 {approx = true} : vector<8x1xf32> -> vector<8x1xf32>
    %40 = vector.broadcast %39 : vector<8x1xf32> to vector<8x8xf32>
    %41 = arith.mulf %36, %40 : vector<8x8xf32>
    %42 = arith.truncf %41 : vector<8x8xf32> to vector<8x8xbf16>
    %cst_26 = arith.constant dense<0.000000e+00> : vector<8x8xf32>
    %43 = tpu.matmul %42, %30, %cst_26 {dimension_numbers = #tpu.dot_dimension_numbers<[1], [0], [0], [1], [0, 0, 1, 1], [], []>} : vector<8x8xbf16>, vector<8x8xbf16>, vector<8x8xf32> -> vector<8x8xf32>
    %44 = arith.truncf %43 : vector<8x8xf32> to vector<8x8xbf16>
    %45 = vector.extract_strided_slice %26 {offsets = [0, 0], sizes = [8, 32], strides = [1, 1]} : vector<32x32xbf16> to vector<8x32xbf16>
    %cst_27 = arith.constant dense<0.000000e+00> : vector<8x32xf32>
    %46 = tpu.matmul %44, %45, %cst_27 {dimension_numbers = #tpu.dot_dimension_numbers<[1], [0], [0], [1], [0, 0, 1, 1], [], []>} : vector<8x8xbf16>, vector<8x32xbf16>, vector<8x32xf32> -> vector<8x32xf32>
    %47 = arith.addf %27, %46 : vector<8x32xf32>
    %48 = vector.extract_strided_slice %23 {offsets = [0, 8], sizes = [8, 8], strides = [1, 1]} : vector<8x32xbf16> to vector<8x8xbf16>
    %49 = vector.extract_strided_slice %24 {offsets = [0, 8], sizes = [8, 8], strides = [1, 1]} : vector<8x32xbf16> to vector<8x8xbf16>
    %50 = vector.extract_strided_slice %25 {offsets = [0, 8], sizes = [8, 8], strides = [1, 1]} : vector<8x32xbf16> to vector<8x8xbf16>
    %cst_28 = arith.constant dense<0.000000e+00> : vector<8x8xf32>
    %51 = tpu.matmul %48, %49, %cst_28 {dimension_numbers = #tpu.dot_dimension_numbers<[1], [1], [0], [0], [0, 0, 1, 0], [], []>} : vector<8x8xbf16>, vector<8x8xbf16>, vector<8x8xf32> -> vector<8x8xf32>
    %cst_29 = arith.constant dense<0xFF800000> : vector<8xf32>
    %52 = vector.multi_reduction <maximumf>, %51, %cst_29 [1] : vector<8x8xf32> to vector<8xf32>
    %53 = vector.shape_cast %52 : vector<8xf32> to vector<8x1xf32>
    %54 = vector.broadcast %53 : vector<8x1xf32> to vector<8x8xf32>
    %55 = arith.subf %51, %54 : vector<8x8xf32>
    %56 = math.exp %55 : vector<8x8xf32>
    %cst_30 = arith.constant dense<0.000000e+00> : vector<8xf32>
    %57 = vector.multi_reduction <add>, %56, %cst_30 [1] : vector<8x8xf32> to vector<8xf32>
    %58 = vector.shape_cast %57 : vector<8xf32> to vector<8x1xf32>
    %59 = tpu.reciprocal %58 {approx = true} : vector<8x1xf32> -> vector<8x1xf32>
    %60 = vector.broadcast %59 : vector<8x1xf32> to vector<8x8xf32>
    %61 = arith.mulf %56, %60 : vector<8x8xf32>
    %62 = arith.truncf %61 : vector<8x8xf32> to vector<8x8xbf16>
    %cst_31 = arith.constant dense<0.000000e+00> : vector<8x8xf32>
    %63 = tpu.matmul %62, %50, %cst_31 {dimension_numbers = #tpu.dot_dimension_numbers<[1], [0], [0], [1], [0, 0, 1, 1], [], []>} : vector<8x8xbf16>, vector<8x8xbf16>, vector<8x8xf32> -> vector<8x8xf32>
    %64 = arith.truncf %63 : vector<8x8xf32> to vector<8x8xbf16>
    %65 = vector.extract_strided_slice %26 {offsets = [8, 0], sizes = [8, 32], strides = [1, 1]} : vector<32x32xbf16> to vector<8x32xbf16>
    %cst_32 = arith.constant dense<0.000000e+00> : vector<8x32xf32>
    %66 = tpu.matmul %64, %65, %cst_32 {dimension_numbers = #tpu.dot_dimension_numbers<[1], [0], [0], [1], [0, 0, 1, 1], [], []>} : vector<8x8xbf16>, vector<8x32xbf16>, vector<8x32xf32> -> vector<8x32xf32>
    %67 = arith.addf %47, %66 : vector<8x32xf32>
    %68 = vector.extract_strided_slice %23 {offsets = [0, 16], sizes = [8, 8], strides = [1, 1]} : vector<8x32xbf16> to vector<8x8xbf16>
    %69 = vector.extract_strided_slice %24 {offsets = [0, 16], sizes = [8, 8], strides = [1, 1]} : vector<8x32xbf16> to vector<8x8xbf16>
    %70 = vector.extract_strided_slice %25 {offsets = [0, 16], sizes = [8, 8], strides = [1, 1]} : vector<8x32xbf16> to vector<8x8xbf16>
    %cst_33 = arith.constant dense<0.000000e+00> : vector<8x8xf32>
    %71 = tpu.matmul %68, %69, %cst_33 {dimension_numbers = #tpu.dot_dimension_numbers<[1], [1], [0], [0], [0, 0, 1, 0], [], []>} : vector<8x8xbf16>, vector<8x8xbf16>, vector<8x8xf32> -> vector<8x8xf32>
    %cst_34 = arith.constant dense<0xFF800000> : vector<8xf32>
    %72 = vector.multi_reduction <maximumf>, %71, %cst_34 [1] : vector<8x8xf32> to vector<8xf32>
    %73 = vector.shape_cast %72 : vector<8xf32> to vector<8x1xf32>
    %74 = vector.broadcast %73 : vector<8x1xf32> to vector<8x8xf32>
    %75 = arith.subf %71, %74 : vector<8x8xf32>
    %76 = math.exp %75 : vector<8x8xf32>
    %cst_35 = arith.constant dense<0.000000e+00> : vector<8xf32>
    %77 = vector.multi_reduction <add>, %76, %cst_35 [1] : vector<8x8xf32> to vector<8xf32>
    %78 = vector.shape_cast %77 : vector<8xf32> to vector<8x1xf32>
    %79 = tpu.reciprocal %78 {approx = true} : vector<8x1xf32> -> vector<8x1xf32>
    %80 = vector.broadcast %79 : vector<8x1xf32> to vector<8x8xf32>
    %81 = arith.mulf %76, %80 : vector<8x8xf32>
    %82 = arith.truncf %81 : vector<8x8xf32> to vector<8x8xbf16>
    %cst_36 = arith.constant dense<0.000000e+00> : vector<8x8xf32>
    %83 = tpu.matmul %82, %70, %cst_36 {dimension_numbers = #tpu.dot_dimension_numbers<[1], [0], [0], [1], [0, 0, 1, 1], [], []>} : vector<8x8xbf16>, vector<8x8xbf16>, vector<8x8xf32> -> vector<8x8xf32>
    %84 = arith.truncf %83 : vector<8x8xf32> to vector<8x8xbf16>
    %85 = vector.extract_strided_slice %26 {offsets = [16, 0], sizes = [8, 32], strides = [1, 1]} : vector<32x32xbf16> to vector<8x32xbf16>
    %cst_37 = arith.constant dense<0.000000e+00> : vector<8x32xf32>
    %86 = tpu.matmul %84, %85, %cst_37 {dimension_numbers = #tpu.dot_dimension_numbers<[1], [0], [0], [1], [0, 0, 1, 1], [], []>} : vector<8x8xbf16>, vector<8x32xbf16>, vector<8x32xf32> -> vector<8x32xf32>
    %87 = arith.addf %67, %86 : vector<8x32xf32>
    %88 = vector.extract_strided_slice %23 {offsets = [0, 24], sizes = [8, 8], strides = [1, 1]} : vector<8x32xbf16> to vector<8x8xbf16>
    %89 = vector.extract_strided_slice %24 {offsets = [0, 24], sizes = [8, 8], strides = [1, 1]} : vector<8x32xbf16> to vector<8x8xbf16>
    %90 = vector.extract_strided_slice %25 {offsets = [0, 24], sizes = [8, 8], strides = [1, 1]} : vector<8x32xbf16> to vector<8x8xbf16>
    %cst_38 = arith.constant dense<0.000000e+00> : vector<8x8xf32>
    %91 = tpu.matmul %88, %89, %cst_38 {dimension_numbers = #tpu.dot_dimension_numbers<[1], [1], [0], [0], [0, 0, 1, 0], [], []>} : vector<8x8xbf16>, vector<8x8xbf16>, vector<8x8xf32> -> vector<8x8xf32>
    %cst_39 = arith.constant dense<0xFF800000> : vector<8xf32>
    %92 = vector.multi_reduction <maximumf>, %91, %cst_39 [1] : vector<8x8xf32> to vector<8xf32>
    %93 = vector.shape_cast %92 : vector<8xf32> to vector<8x1xf32>
    %94 = vector.broadcast %93 : vector<8x1xf32> to vector<8x8xf32>
    %95 = arith.subf %91, %94 : vector<8x8xf32>
    %96 = math.exp %95 : vector<8x8xf32>
    %cst_40 = arith.constant dense<0.000000e+00> : vector<8xf32>
    %97 = vector.multi_reduction <add>, %96, %cst_40 [1] : vector<8x8xf32> to vector<8xf32>
    %98 = vector.shape_cast %97 : vector<8xf32> to vector<8x1xf32>
    %99 = tpu.reciprocal %98 {approx = true} : vector<8x1xf32> -> vector<8x1xf32>
    %100 = vector.broadcast %99 : vector<8x1xf32> to vector<8x8xf32>
    %101 = arith.mulf %96, %100 : vector<8x8xf32>
    %102 = arith.truncf %101 : vector<8x8xf32> to vector<8x8xbf16>
    %cst_41 = arith.constant dense<0.000000e+00> : vector<8x8xf32>
    %103 = tpu.matmul %102, %90, %cst_41 {dimension_numbers = #tpu.dot_dimension_numbers<[1], [0], [0], [1], [0, 0, 1, 1], [], []>} : vector<8x8xbf16>, vector<8x8xbf16>, vector<8x8xf32> -> vector<8x8xf32>
    %104 = arith.truncf %103 : vector<8x8xf32> to vector<8x8xbf16>
    %105 = vector.extract_strided_slice %26 {offsets = [24, 0], sizes = [8, 32], strides = [1, 1]} : vector<32x32xbf16> to vector<8x32xbf16>
    %cst_42 = arith.constant dense<0.000000e+00> : vector<8x32xf32>
    %106 = tpu.matmul %104, %105, %cst_42 {dimension_numbers = #tpu.dot_dimension_numbers<[1], [0], [0], [1], [0, 0, 1, 1], [], []>} : vector<8x8xbf16>, vector<8x32xbf16>, vector<8x32xf32> -> vector<8x32xf32>
    %107 = arith.addf %87, %106 : vector<8x32xf32>
    %108 = arith.addf %1, %107 : vector<8x32xf32>
    %c0_43 = arith.constant 0 : index
    %c0_44 = arith.constant 0 : index
    %109 = vector.load %arg10[%c0_43, %c0_44] : memref<1x32xf32, #tpu.memory_space<vmem>>, vector<1x32xf32>
    %110 = vector.broadcast %109 : vector<1x32xf32> to vector<8x32xf32>
    %111 = arith.addf %108, %110 : vector<8x32xf32>
    %cst_45 = arith.constant dense<0.000000e+00> : vector<8xf32>
    %112 = vector.multi_reduction <add>, %111, %cst_45 [1] : vector<8x32xf32> to vector<8xf32>
    %113 = vector.shape_cast %112 : vector<8xf32> to vector<8x1xf32>
    %cst_46 = arith.constant 3.200000e+01 : f32
    %114 = vector.broadcast %cst_46 : f32 to vector<8x1xf32>
    %115 = arith.divf %113, %114 : vector<8x1xf32>
    %116 = vector.broadcast %115 : vector<8x1xf32> to vector<8x32xf32>
    %117 = arith.subf %111, %116 : vector<8x32xf32>
    %118 = arith.mulf %117, %117 : vector<8x32xf32>
    %cst_47 = arith.constant dense<0.000000e+00> : vector<8xf32>
    %119 = vector.multi_reduction <add>, %118, %cst_47 [1] : vector<8x32xf32> to vector<8xf32>
    %120 = vector.shape_cast %119 : vector<8xf32> to vector<8x1xf32>
    %cst_48 = arith.constant 3.200000e+01 : f32
    %121 = vector.broadcast %cst_48 : f32 to vector<8x1xf32>
    %122 = arith.divf %120, %121 : vector<8x1xf32>
    %123 = vector.broadcast %115 : vector<8x1xf32> to vector<8x32xf32>
    %124 = arith.subf %111, %123 : vector<8x32xf32>
    %cst_49 = arith.constant 9.99999996E-13 : f32
    %125 = vector.broadcast %cst_49 : f32 to vector<8x1xf32>
    %126 = arith.addf %122, %125 : vector<8x1xf32>
    %127 = math.rsqrt %126 : vector<8x1xf32>
    %128 = vector.broadcast %127 : vector<8x1xf32> to vector<8x32xf32>
    %129 = arith.mulf %124, %128 : vector<8x32xf32>
    %c0_50 = arith.constant 0 : index
    %c0_51 = arith.constant 0 : index
    %130 = vector.load %arg11[%c0_50, %c0_51] : memref<1x32xf32, #tpu.memory_space<vmem>>, vector<1x32xf32>
    %131 = vector.broadcast %130 : vector<1x32xf32> to vector<8x32xf32>
    %132 = arith.mulf %129, %131 : vector<8x32xf32>
    %c0_52 = arith.constant 0 : index
    %c0_53 = arith.constant 0 : index
    %133 = vector.load %arg12[%c0_52, %c0_53] : memref<1x32xf32, #tpu.memory_space<vmem>>, vector<1x32xf32>
    %134 = vector.broadcast %133 : vector<1x32xf32> to vector<8x32xf32>
    %135 = arith.addf %132, %134 : vector<8x32xf32>
    %c0_54 = arith.constant 0 : index
    %c0_55 = arith.constant 0 : index
    %c0_56 = arith.constant 0 : index
    %136 = vector.load %arg13[%c0_54, %c0_55, %c0_56] : memref<1x8x32xf32, #tpu.memory_space<vmem>>, vector<1x8x32xf32>
    %137 = vector.shape_cast %136 : vector<1x8x32xf32> to vector<8x32xf32>
    %138 = vector.shape_cast %135 : vector<8x32xf32> to vector<1x8x32xf32>
    tpu.vector_store %arg13[%c0_54, %c0_55, %c0_56], %138 {strides = array<i32>} : memref<1x8x32xf32, #tpu.memory_space<vmem>>, vector<1x8x32xf32>,
    return
  }
  func.func @transform_0(%arg0: i32) -> (i32, i32, i32) {
    %c0_i32 = arith.constant 0 : i32
    %c0_i32_0 = arith.constant 0 : i32
    %c0_i32_1 = arith.constant 0 : i32
    return %arg0, %c0_i32, %c0_i32_0 : i32, i32, i32
  }
  func.func @transform_1(%arg0: i32) -> (i32, i32, i32) {
    %c0_i32 = arith.constant 0 : i32
    %c0_i32_0 = arith.constant 0 : i32
    %c0_i32_1 = arith.constant 0 : i32
    return %arg0, %c0_i32, %c0_i32_0 : i32, i32, i32
  }
  func.func @transform_2(%arg0: i32) -> (i32, i32) {
    %c0_i32 = arith.constant 0 : i32
    %c0_i32_0 = arith.constant 0 : i32
    %c0_i32_1 = arith.constant 0 : i32
    return %c0_i32, %c0_i32_0 : i32, i32
  }
  func.func @transform_3(%arg0: i32) -> (i32, i32) {
    %c0_i32 = arith.constant 0 : i32
    %c0_i32_0 = arith.constant 0 : i32
    %c0_i32_1 = arith.constant 0 : i32
    return %c0_i32, %c0_i32_0 : i32, i32
  }
  func.func @transform_4(%arg0: i32) -> (i32, i32) {
    %c0_i32 = arith.constant 0 : i32
    %c0_i32_0 = arith.constant 0 : i32
    %c0_i32_1 = arith.constant 0 : i32
    return %c0_i32, %c0_i32_0 : i32, i32
  }
  func.func @transform_5(%arg0: i32) -> (i32, i32) {
    %c0_i32 = arith.constant 0 : i32
    %c0_i32_0 = arith.constant 0 : i32
    %c0_i32_1 = arith.constant 0 : i32
    return %c0_i32, %c0_i32_0 : i32, i32
  }
  func.func @transform_6(%arg0: i32) -> (i32, i32) {
    %c0_i32 = arith.constant 0 : i32
    %c0_i32_0 = arith.constant 0 : i32
    %c0_i32_1 = arith.constant 0 : i32
    return %c0_i32, %c0_i32_0 : i32, i32
  }
  func.func @transform_7(%arg0: i32) -> (i32, i32) {
    %c0_i32 = arith.constant 0 : i32
    %c0_i32_0 = arith.constant 0 : i32
    %c0_i32_1 = arith.constant 0 : i32
    return %c0_i32, %c0_i32_0 : i32, i32
  }
  func.func @transform_8(%arg0: i32) -> (i32, i32) {
    %c0_i32 = arith.constant 0 : i32
    %c0_i32_0 = arith.constant 0 : i32
    %c0_i32_1 = arith.constant 0 : i32
    return %c0_i32, %c0_i32_0 : i32, i32
  }
  func.func @transform_9(%arg0: i32) -> (i32, i32) {
    %c0_i32 = arith.constant 0 : i32
    %c0_i32_0 = arith.constant 0 : i32
    %c0_i32_1 = arith.constant 0 : i32
    return %c0_i32, %c0_i32_0 : i32, i32
  }
  func.func @transform_10(%arg0: i32) -> (i32, i32) {
    %c0_i32 = arith.constant 0 : i32
    %c0_i32_0 = arith.constant 0 : i32
    %c0_i32_1 = arith.constant 0 : i32
    return %c0_i32, %c0_i32_0 : i32, i32
  }
  func.func @transform_11(%arg0: i32) -> (i32, i32) {
    %c0_i32 = arith.constant 0 : i32
    %c0_i32_0 = arith.constant 0 : i32
    %c0_i32_1 = arith.constant 0 : i32
    return %c0_i32, %c0_i32_0 : i32, i32
  }
  func.func @transform_12(%arg0: i32) -> (i32, i32, i32) {
    %c0_i32 = arith.constant 0 : i32
    %c0_i32_0 = arith.constant 0 : i32
    %c0_i32_1 = arith.constant 0 : i32
    return %arg0, %c0_i32, %c0_i32_0 : i32, i32, i32
  }
}

</mosaic_0001>

<llo_original>
// kernel: tpu_custom_call.1
$region0: #{tpu_custom_call.1}
  #allocation0 [shape = 'u32[]', space=smem, size = 0x4, offset = 0x4, fixed_abs, tag = 'smem constant byte address 0x4 - core index']
  #allocation1 [shape = 'u32[72,128]{1,0:T(1,128)}', space=vmem, size = 0x9000, scoped, tag = 'internal scratch']
  %s0 = inlined_call_operand.hbm [shape: f32[2,8,32], index: 0, kind: input, shape index: {}]
  %s1 = inlined_call_operand.hbm [shape: f32[2,8,32], index: 1, kind: input, shape index: {}]
  %s2 = inlined_call_operand.hbm [shape: bf16[32,32], index: 2, kind: input, shape index: {}]
  %s3 = inlined_call_operand.vmem [shape: f32[1,32], index: 3, kind: input, shape index: {}]
  %s4 = inlined_call_operand.hbm [shape: bf16[32,32], index: 4, kind: input, shape index: {}]
  %s5 = inlined_call_operand.vmem [shape: f32[1,32], index: 5, kind: input, shape index: {}]
  %s6 = inlined_call_operand.hbm [shape: bf16[32,32], index: 6, kind: input, shape index: {}]
  %s7 = inlined_call_operand.vmem [shape: f32[1,32], index: 7, kind: input, shape index: {}]
  %s8 = inlined_call_operand.hbm [shape: bf16[32,32], index: 8, kind: input, shape index: {}]
  %s9 = inlined_call_operand.vmem [shape: f32[1,32], index: 9, kind: input, shape index: {}]
  %s10 = inlined_call_operand.vmem [shape: f32[1,32], index: 10, kind: input, shape index: {}]
  %s11 = inlined_call_operand.vmem [shape: f32[1,32], index: 11, kind: input, shape index: {}]
  %s12 = inlined_call_operand.hbm [shape: f32[2,8,32], index: 12, kind: output, shape index: {}]
  %s13 = sld [smem:[#allocation0]]
  $region105: #{tpu_custom_call.1} parent=0
    _
  %s15 = ssub.s32 1, %s13
  %s16 = scalar_select 0, %s15, %s13
  $region1: #{tpu_custom_call.1} parent=0
    #allocation2 [shape = 'u8[8192]{0}', space=vmem, size = 0x2000, scoped, tag = 'input window, operand 0']
    #allocation3 [shape = 's32[2]{0}', space=sflag, size = 0x8, scoped, tag = 'scoped memory for tpu_custom_call.1']
    #allocation4 [shape = 's32[2]{0}', space=sflag, size = 0x8, scoped, tag = 'scoped memory for tpu_custom_call.1']
    #allocation5 [shape = 'u8[8192]{0}', space=vmem, size = 0x2000, scoped, tag = 'input window, operand 1']
    #allocation6 [shape = 's32[2]{0}', space=sflag, size = 0x8, scoped, tag = 'scoped memory for tpu_custom_call.1']
    #allocation7 [shape = 'u8[8192]{0}', space=vmem, size = 0x2000, scoped, tag = 'input window, operand 2, single buffered']
    #allocation8 [shape = 'u8[8192]{0}', space=vmem, size = 0x2000, scoped, tag = 'input window, operand 4, single buffered']
    #allocation9 [shape = 's32[1]{0}', space=sflag, size = 0x4, scoped, tag = 'scoped memory for tpu_custom_call.1']
    #allocation10 [shape = 'u8[8192]{0}', space=vmem, size = 0x2000, scoped, tag = 'input window, operand 6, single buffered']
    #allocation11 [shape = 'u8[8192]{0}', space=vmem, size = 0x2000, scoped, tag = 'input window, operand 8, single buffered']
    #allocation12 [shape = 's32[1]{0}', space=sflag, size = 0x4, scoped, tag = 'scoped memory for tpu_custom_call.1']
    #allocation13 [shape = 'u8[8192]{0}', space=vmem, size = 0x2000, scoped, tag = 'output window, operand 0']
    %17 = vsyncpa [#allocation3], 0
    %s18 = scalar_lea.sflag [#allocation3], 1
    %19 = vsyncpa %s18, 0
    %20 = vsyncpa [#allocation6], 0
    %s21 = scalar_lea.sflag [#allocation6], 1
    %22 = vsyncpa %s21, 0
    %23 = vsyncpa [#allocation9], 0
    %24 = vsyncpa [#allocation12], 0
    %25 = vsyncpa [#allocation4], 0
    %s26 = scalar_lea.sflag [#allocation4], 1
    %27 = vsyncpa %s26, 0
    loop: start=0, step=1, limit=4
    $region2: #{tpu_custom_call.1} parent=1 // loop_pre_header
      _
    $region3: #{tpu_custom_call.1} parent=1 // loop_header
      %s29 = sphi 0, %s33
      %p30 = scmp.ge.s32.totalorder %s29, 4
      %s39 = sphi 0, %s41
      %s42 = sphi 0, %s39
      %s43 = sphi 0, %s42
      %s59 = sphi 0, %s43
      %s65 = sphi 0, %s67
      %s68 = sphi 0, %s65
      %s69 = sphi 0, %s68
      %s85 = sphi 0, %s69
      %s89 = sphi 0, %s89
      %s91 = sphi 0, %s89
      %s92 = sphi 0, %s91
      %s106 = sphi 0, %s92
      %s110 = sphi 0, %s110
      %s112 = sphi 0, %s110
      %s113 = sphi 0, %s112
      %s127 = sphi 0, %s113
      %s131 = sphi 0, %s131
      %s133 = sphi 0, %s131
      %s134 = sphi 0, %s133
      %s148 = sphi 0, %s134
      %s152 = sphi 0, %s152
      %s154 = sphi 0, %s152
      %s155 = sphi 0, %s154
      %s169 = sphi 0, %s155
      %s173 = sphi 0, %s173
      %s175 = sphi 0, %s173
      %s176 = sphi 0, %s175
      %s190 = sphi 0, %s176
      %s194 = sphi 0, %s194
      %s196 = sphi 0, %s194
      %s197 = sphi 0, %s196
      %s211 = sphi 0, %s197
      %s215 = sphi 0, %s215
      %s217 = sphi 0, %s215
      %s218 = sphi 0, %s217
      %s232 = sphi 0, %s218
      %s236 = sphi 0, %s236
      %s238 = sphi 0, %s236
      %s239 = sphi 0, %s238
      %s253 = sphi 0, %s239
      %s257 = sphi 0, %s257
      %s259 = sphi 0, %s257
      %s260 = sphi 0, %s259
      %s274 = sphi 0, %s260
      %s278 = sphi 0, %s278
      %s280 = sphi 0, %s278
      %s281 = sphi 0, %s280
      %s295 = sphi 0, %s281
      %s301 = sphi 0, %s303
      %s304 = sphi 0, %s301
      %s305 = sphi 0, %s304
      %s321 = sphi 0, %s305
    $region4: #{tpu_custom_call.1} parent=1 // loop_header_branch
      %32 = sbr.rel (%p30) target = $region8
    $region5: #{tpu_custom_call.1} parent=1 // loop_body
      %s34 = ssub.s32 %s29, 1
      %s35 = ssub.s32 %s29, 2
      %s36 = sadd.s32 %s29, 1
      %s37 = ssub.s32 %s29, %s36
      %p38 = scmp.eq.s32.totalorder %s37, 0
      %s40 = sadd.s32 %s39, 1
      %s41 = scalar_select %p38, %s39, %s40
      %p44 = pneg %p38
      %p45 = scmp.eq.s32.totalorder %s29, 1
      %p46 = por %p44, %p45
      %p47 = scmp.ne.s32.totalorder %s39, %s42
      %p48 = scmp.eq.s32.totalorder %s29, 0
      %p49 = por %p47, %p48
      %p50 = scmp.ne.s32.totalorder %s39, %s42
      %p51 = scmp.eq.s32.totalorder %s34, 1
      %p52 = por %p50, %p51
      %p53 = scmp.ne.s32.totalorder %s42, %s43
      %p54 = scmp.eq.s32.totalorder %s34, 0
      %p55 = por %p53, %p54
      %p56 = scmp.ne.s32.totalorder %s42, %s43
      %p57 = scmp.eq.s32.totalorder %s35, 1
      %p58 = por %p56, %p57
      %p60 = scmp.ne.s32.totalorder %s43, %s59
      %p61 = scmp.eq.s32.totalorder %s35, 0
      %p62 = por %p60, %p61
      %s63 = ssub.s32 %s29, %s36
      %p64 = scmp.eq.s32.totalorder %s63, 0
      %s66 = sadd.s32 %s65, 1
      %s67 = scalar_select %p64, %s65, %s66
      %p70 = pneg %p64
      %p71 = scmp.eq.s32.totalorder %s29, 1
      %p72 = por %p70, %p71
      %p73 = scmp.ne.s32.totalorder %s65, %s68
      %p74 = scmp.eq.s32.totalorder %s29, 0
      %p75 = por %p73, %p74
      %p76 = scmp.ne.s32.totalorder %s65, %s68
      %p77 = scmp.eq.s32.totalorder %s34, 1
      %p78 = por %p76, %p77
      %p79 = scmp.ne.s32.totalorder %s68, %s69
      %p80 = scmp.eq.s32.totalorder %s34, 0
      %p81 = por %p79, %p80
      %p82 = scmp.ne.s32.totalorder %s68, %s69
      %p83 = scmp.eq.s32.totalorder %s35, 1
      %p84 = por %p82, %p83
      %p86 = scmp.ne.s32.totalorder %s69, %s85
      %p87 = scmp.eq.s32.totalorder %s35, 0
      %p88 = por %p86, %p87
      %s90 = sadd.s32 %s89, 1
      %p93 = scmp.eq.s32.totalorder %s29, 1
      %p94 = scmp.ne.s32.totalorder %s89, %s91
      %p95 = scmp.eq.s32.totalorder %s29, 0
      %p96 = por %p94, %p95
      %p97 = scmp.ne.s32.totalorder %s89, %s91
      %p98 = scmp.eq.s32.totalorder %s34, 1
      %p99 = por %p97, %p98
      %p100 = scmp.ne.s32.totalorder %s91, %s92
      %p101 = scmp.eq.s32.totalorder %s34, 0
      %p102 = por %p100, %p101
      %p103 = scmp.ne.s32.totalorder %s91, %s92
      %p104 = scmp.eq.s32.totalorder %s35, 1
      %p105 = por %p103, %p104
      %p107 = scmp.ne.s32.totalorder %s92, %s106
      %p108 = scmp.eq.s32.totalorder %s35, 0
      %p109 = por %p107, %p108
      %s111 = sadd.s32 %s110, 1
      %p114 = scmp.eq.s32.totalorder %s29, 1
      %p115 = scmp.ne.s32.totalorder %s110, %s112
      %p116 = scmp.eq.s32.totalorder %s29, 0
      %p117 = por %p115, %p116
      %p118 = scmp.ne.s32.totalorder %s110, %s112
      %p119 = scmp.eq.s32.totalorder %s34, 1
      %p120 = por %p118, %p119
      %p121 = scmp.ne.s32.totalorder %s112, %s113
      %p122 = scmp.eq.s32.totalorder %s34, 0
      %p123 = por %p121, %p122
      %p124 = scmp.ne.s32.totalorder %s112, %s113
      %p125 = scmp.eq.s32.totalorder %s35, 1
      %p126 = por %p124, %p125
      %p128 = scmp.ne.s32.totalorder %s113, %s127
      %p129 = scmp.eq.s32.totalorder %s35, 0
      %p130 = por %p128, %p129
      %s132 = sadd.s32 %s131, 1
      %p135 = scmp.eq.s32.totalorder %s29, 1
      %p136 = scmp.ne.s32.totalorder %s131, %s133
      %p137 = scmp.eq.s32.totalorder %s29, 0
      %p138 = por %p136, %p137
      %p139 = scmp.ne.s32.totalorder %s131, %s133
      %p140 = scmp.eq.s32.totalorder %s34, 1
      %p141 = por %p139, %p140
      %p142 = scmp.ne.s32.totalorder %s133, %s134
      %p143 = scmp.eq.s32.totalorder %s34, 0
      %p144 = por %p142, %p143
      %p145 = scmp.ne.s32.totalorder %s133, %s134
      %p146 = scmp.eq.s32.totalorder %s35, 1
      %p147 = por %p145, %p146
      %p149 = scmp.ne.s32.totalorder %s134, %s148
      %p150 = scmp.eq.s32.totalorder %s35, 0
      %p151 = por %p149, %p150
      %s153 = sadd.s32 %s152, 1
      %p156 = scmp.eq.s32.totalorder %s29, 1
      %p157 = scmp.ne.s32.totalorder %s152, %s154
      %p158 = scmp.eq.s32.totalorder %s29, 0
      %p159 = por %p157, %p158
      %p160 = scmp.ne.s32.totalorder %s152, %s154
      %p161 = scmp.eq.s32.totalorder %s34, 1
      %p162 = por %p160, %p161
      %p163 = scmp.ne.s32.totalorder %s154, %s155
      %p164 = scmp.eq.s32.totalorder %s34, 0
      %p165 = por %p163, %p164
      %p166 = scmp.ne.s32.totalorder %s154, %s155
      %p167 = scmp.eq.s32.totalorder %s35, 1
      %p168 = por %p166, %p167
      %p170 = scmp.ne.s32.totalorder %s155, %s169
      %p171 = scmp.eq.s32.totalorder %s35, 0
      %p172 = por %p170, %p171
      %s174 = sadd.s32 %s173, 1
      %p177 = scmp.eq.s32.totalorder %s29, 1
      %p178 = scmp.ne.s32.totalorder %s173, %s175
      %p179 = scmp.eq.s32.totalorder %s29, 0
      %p180 = por %p178, %p179
      %p181 = scmp.ne.s32.totalorder %s173, %s175
      %p182 = scmp.eq.s32.totalorder %s34, 1
      %p183 = por %p181, %p182
      %p184 = scmp.ne.s32.totalorder %s175, %s176
      %p185 = scmp.eq.s32.totalorder %s34, 0
      %p186 = por %p184, %p185
      %p187 = scmp.ne.s32.totalorder %s175, %s176
      %p188 = scmp.eq.s32.totalorder %s35, 1
      %p189 = por %p187, %p188
      %p191 = scmp.ne.s32.totalorder %s176, %s190
      %p192 = scmp.eq.s32.totalorder %s35, 0
      %p193 = por %p191, %p192
      %s195 = sadd.s32 %s194, 1
      %p198 = scmp.eq.s32.totalorder %s29, 1
      %p199 = scmp.ne.s32.totalorder %s194, %s196
      %p200 = scmp.eq.s32.totalorder %s29, 0
      %p201 = por %p199, %p200
      %p202 = scmp.ne.s32.totalorder %s194, %s196
      %p203 = scmp.eq.s32.totalorder %s34, 1
      %p204 = por %p202, %p203
      %p205 = scmp.ne.s32.totalorder %s196, %s197
      %p206 = scmp.eq.s32.totalorder %s34, 0
      %p207 = por %p205, %p206
      %p208 = scmp.ne.s32.totalorder %s196, %s197
      %p209 = scmp.eq.s32.totalorder %s35, 1
      %p210 = por %p208, %p209
      %p212 = scmp.ne.s32.totalorder %s197, %s211
      %p213 = scmp.eq.s32.totalorder %s35, 0
      %p214 = por %p212, %p213
      %s216 = sadd.s32 %s215, 1
      %p219 = scmp.eq.s32.totalorder %s29, 1
      %p220 = scmp.ne.s32.totalorder %s215, %s217
      %p221 = scmp.eq.s32.totalorder %s29, 0
      %p222 = por %p220, %p221
      %p223 = scmp.ne.s32.totalorder %s215, %s217
      %p224 = scmp.eq.s32.totalorder %s34, 1
      %p225 = por %p223, %p224
      %p226 = scmp.ne.s32.totalorder %s217, %s218
      %p227 = scmp.eq.s32.totalorder %s34, 0
      %p228 = por %p226, %p227
      %p229 = scmp.ne.s32.totalorder %s217, %s218
      %p230 = scmp.eq.s32.totalorder %s35, 1
      %p231 = por %p229, %p230
      %p233 = scmp.ne.s32.totalorder %s218, %s232
      %p234 = scmp.eq.s32.totalorder %s35, 0
      %p235 = por %p233, %p234
      %s237 = sadd.s32 %s236, 1
      %p240 = scmp.eq.s32.totalorder %s29, 1
      %p241 = scmp.ne.s32.totalorder %s236, %s238
      %p242 = scmp.eq.s32.totalorder %s29, 0
      %p243 = por %p241, %p242
      %p244 = scmp.ne.s32.totalorder %s236, %s238
      %p245 = scmp.eq.s32.totalorder %s34, 1
      %p246 = por %p244, %p245
      %p247 = scmp.ne.s32.totalorder %s238, %s239
      %p248 = scmp.eq.s32.totalorder %s34, 0
      %p249 = por %p247, %p248
      %p250 = scmp.ne.s32.totalorder %s238, %s239
      %p251 = scmp.eq.s32.totalorder %s35, 1
      %p252 = por %p250, %p251
      %p254 = scmp.ne.s32.totalorder %s239, %s253
      %p255 = scmp.eq.s32.totalorder %s35, 0
      %p256 = por %p254, %p255
      %s258 = sadd.s32 %s257, 1
      %p261 = scmp.eq.s32.totalorder %s29, 1
      %p262 = scmp.ne.s32.totalorder %s257, %s259
      %p263 = scmp.eq.s32.totalorder %s29, 0
      %p264 = por %p262, %p263
      %p265 = scmp.ne.s32.totalorder %s257, %s259
      %p266 = scmp.eq.s32.totalorder %s34, 1
      %p267 = por %p265, %p266
      %p268 = scmp.ne.s32.totalorder %s259, %s260
      %p269 = scmp.eq.s32.totalorder %s34, 0
      %p270 = por %p268, %p269
      %p271 = scmp.ne.s32.totalorder %s259, %s260
      %p272 = scmp.eq.s32.totalorder %s35, 1
      %p273 = por %p271, %p272
      %p275 = scmp.ne.s32.totalorder %s260, %s274
      %p276 = scmp.eq.s32.totalorder %s35, 0
      %p277 = por %p275, %p276
      %s279 = sadd.s32 %s278, 1
      %p282 = scmp.eq.s32.totalorder %s29, 1
      %p283 = scmp.ne.s32.totalorder %s278, %s280
      %p284 = scmp.eq.s32.totalorder %s29, 0
      %p285 = por %p283, %p284
      %p286 = scmp.ne.s32.totalorder %s278, %s280
      %p287 = scmp.eq.s32.totalorder %s34, 1
      %p288 = por %p286, %p287
      %p289 = scmp.ne.s32.totalorder %s280, %s281
      %p290 = scmp.eq.s32.totalorder %s34, 0
      %p291 = por %p289, %p290
      %p292 = scmp.ne.s32.totalorder %s280, %s281
      %p293 = scmp.eq.s32.totalorder %s35, 1
      %p294 = por %p292, %p293
      %p296 = scmp.ne.s32.totalorder %s281, %s295
      %p297 = scmp.eq.s32.totalorder %s35, 0
      %p298 = por %p296, %p297
      %s299 = ssub.s32 %s29, %s36
      %p300 = scmp.eq.s32.totalorder %s299, 0
      %s302 = sadd.s32 %s301, 1
      %s303 = scalar_select %p300, %s301, %s302
      %p306 = pneg %p300
      %p307 = scmp.eq.s32.totalorder %s29, 1
      %p308 = por %p306, %p307
      %p309 = scmp.ne.s32.totalorder %s301, %s304
      %p310 = scmp.eq.s32.totalorder %s29, 0
      %p311 = por %p309, %p310
      %p312 = scmp.ne.s32.totalorder %s301, %s304
      %p313 = scmp.eq.s32.totalorder %s34, 1
      %p314 = por %p312, %p313
      %p315 = scmp.ne.s32.totalorder %s304, %s305
      %p316 = scmp.eq.s32.totalorder %s34, 0
      %p317 = por %p315, %p316
      %p318 = scmp.ne.s32.totalorder %s304, %s305
      %p319 = scmp.eq.s32.totalorder %s35, 1
      %p320 = por %p318, %p319
      %p322 = scmp.ne.s32.totalorder %s305, %s321
      %p323 = scmp.eq.s32.totalorder %s35, 0
      %p324 = por %p322, %p323
      %p325 = scmp.le.s32.totalorder 1, %s29
      %p326 = scmp.lt.s32.totalorder %s29, 3
      %p327 = pnand %p325, %p326
      %p328 = pneg %p327
      // Predicated region
      $region9: #{tpu_custom_call.1} parent=5 // pred_check
        _
      $region10: #{tpu_custom_call.1} parent=5 // pred_check_branch
        %330 = sbr.rel (%p327) target = $region12
      $region11: #{tpu_custom_call.1} parent=5 // pred_region
        %s331 = ssub.s32 %s29, 1
        // Predicated region
        $region13: #{tpu_custom_call.1} parent=11 // pred_check
          %p332 = pneg %p102
        $region14: #{tpu_custom_call.1} parent=11 // pred_check_branch
          %334 = sbr.rel (%p332) target = $region16
        $region15: #{tpu_custom_call.1} parent=11 // pred_region
          %336 = vsyncadd [#allocation6], 0
          %s337 = sshll.u32 %s2, 4
          %s338 = int_to_ptr.hbm [resolvable:$true] %s337
          %s339 = sshll.u32 [#allocation7], 4
          %s340 = int_to_ptr.vmem [resolvable:$true] %s339
          %345 = dma.hbm_to_vmem [thread:$0]  %s338, 256, %s340, [#allocation6], 64, 64, 4
        $region16: #{tpu_custom_call.1} parent=11 // pred_fallthru
          _
        // Predicated region
        $region17: #{tpu_custom_call.1} parent=11 // pred_check
          %p346 = pneg %p123
        $region18: #{tpu_custom_call.1} parent=11 // pred_check_branch
          %348 = sbr.rel (%p346) target = $region20
        $region19: #{tpu_custom_call.1} parent=11 // pred_region
          _
        $region20: #{tpu_custom_call.1} parent=11 // pred_fallthru
          _
        // Predicated region
        $region21: #{tpu_custom_call.1} parent=11 // pred_check
          %p349 = pneg %p144
        $region22: #{tpu_custom_call.1} parent=11 // pred_check_branch
          %351 = sbr.rel (%p349) target = $region24
        $region23: #{tpu_custom_call.1} parent=11 // pred_region
          %353 = vsyncadd [#allocation9], 0
          %s354 = sshll.u32 %s4, 4
          %s355 = int_to_ptr.hbm [resolvable:$true] %s354
          %s356 = sshll.u32 [#allocation8], 4
          %s357 = int_to_ptr.vmem [resolvable:$true] %s356
          %362 = dma.hbm_to_vmem [thread:$0]  %s355, 256, %s357, [#allocation9], 64, 64, 4
        $region24: #{tpu_custom_call.1} parent=11 // pred_fallthru
          _
        // Predicated region
        $region25: #{tpu_custom_call.1} parent=11 // pred_check
          %p363 = pneg %p165
        $region26: #{tpu_custom_call.1} parent=11 // pred_check_branch
          %365 = sbr.rel (%p363) target = $region28
        $region27: #{tpu_custom_call.1} parent=11 // pred_region
          _
        $region28: #{tpu_custom_call.1} parent=11 // pred_fallthru
          _
        // Predicated region
        $region29: #{tpu_custom_call.1} parent=11 // pred_check
          %p366 = pneg %p186
        $region30: #{tpu_custom_call.1} parent=11 // pred_check_branch
          %368 = sbr.rel (%p366) target = $region32
        $region31: #{tpu_custom_call.1} parent=11 // pred_region
          %370 = vsyncadd [#allocation9], 0
          %s371 = sshll.u32 %s6, 4
          %s372 = int_to_ptr.hbm [resolvable:$true] %s371
          %s373 = sshll.u32 [#allocation10], 4
          %s374 = int_to_ptr.vmem [resolvable:$true] %s373
          %379 = dma.hbm_to_vmem [thread:$0]  %s372, 256, %s374, [#allocation9], 64, 64, 4
        $region32: #{tpu_custom_call.1} parent=11 // pred_fallthru
          _
        // Predicated region
        $region33: #{tpu_custom_call.1} parent=11 // pred_check
          %p380 = pneg %p207
        $region34: #{tpu_custom_call.1} parent=11 // pred_check_branch
          %382 = sbr.rel (%p380) target = $region36
        $region35: #{tpu_custom_call.1} parent=11 // pred_region
          _
        $region36: #{tpu_custom_call.1} parent=11 // pred_fallthru
          _
        // Predicated region
        $region37: #{tpu_custom_call.1} parent=11 // pred_check
          %p383 = pneg %p228
        $region38: #{tpu_custom_call.1} parent=11 // pred_check_branch
          %385 = sbr.rel (%p383) target = $region40
        $region39: #{tpu_custom_call.1} parent=11 // pred_region
          %387 = vsyncadd [#allocation12], 0
          %s388 = sshll.u32 %s8, 4
          %s389 = int_to_ptr.hbm [resolvable:$true] %s388
          %s390 = sshll.u32 [#allocation11], 4
          %s391 = int_to_ptr.vmem [resolvable:$true] %s390
          %396 = dma.hbm_to_vmem [thread:$0]  %s389, 256, %s391, [#allocation12], 64, 64, 4
        $region40: #{tpu_custom_call.1} parent=11 // pred_fallthru
          _
        // Predicated region
        $region41: #{tpu_custom_call.1} parent=11 // pred_check
          %p397 = pneg %p249
        $region42: #{tpu_custom_call.1} parent=11 // pred_check_branch
          %399 = sbr.rel (%p397) target = $region44
        $region43: #{tpu_custom_call.1} parent=11 // pred_region
          _
        $region44: #{tpu_custom_call.1} parent=11 // pred_fallthru
          _
        // Predicated region
        $region45: #{tpu_custom_call.1} parent=11 // pred_check
          %p400 = pneg %p270
        $region46: #{tpu_custom_call.1} parent=11 // pred_check_branch
          %402 = sbr.rel (%p400) target = $region48
        $region47: #{tpu_custom_call.1} parent=11 // pred_region
          _
        $region48: #{tpu_custom_call.1} parent=11 // pred_fallthru
          _
        // Predicated region
        $region49: #{tpu_custom_call.1} parent=11 // pred_check
          %p403 = pneg %p291
        $region50: #{tpu_custom_call.1} parent=11 // pred_check_branch
          %405 = sbr.rel (%p403) target = $region52
        $region51: #{tpu_custom_call.1} parent=11 // pred_region
          _
        $region52: #{tpu_custom_call.1} parent=11 // pred_fallthru
          _
      $region12: #{tpu_custom_call.1} parent=5 // pred_fallthru
        _
      %p406 = scmp.lt.s32.totalorder %s29, 2
      // Predicated region
      $region53: #{tpu_custom_call.1} parent=5 // pred_check
        %p407 = pneg %p406
      $region54: #{tpu_custom_call.1} parent=5 // pred_check_branch
        %409 = sbr.rel (%p407) target = $region56
      $region55: #{tpu_custom_call.1} parent=5 // pred_region
        // Predicated region
        $region57: #{tpu_custom_call.1} parent=55 // pred_check
          %p410 = pneg %p49
        $region58: #{tpu_custom_call.1} parent=55 // pred_check_branch
          %412 = sbr.rel (%p410) target = $region60
        $region59: #{tpu_custom_call.1} parent=55 // pred_region
          %s413 = sand.u32 %s39, 1
          %s414 = scalar_lea.sflag [#allocation3], %s413
          %s415 = sand.u32 %s39, 1
          %s416 = smul.addr %s415, 8
          %s417 = scalar_lea.vmem [#allocation2], %s416
          %419 = vsyncadd %s414, 0
          %s420 = smul.addr %s29, 8
          %s421 = scalar_lea.hbm %s0, %s420
          %s423 = sshll.u32 %s421, 4
          %s424 = int_to_ptr.hbm [resolvable:$true] %s423
          %s425 = sshll.u32 %s417, 4
          %s426 = int_to_ptr.vmem [resolvable:$true] %s425
          %428 = dma.hbm_to_vmem [thread:$0]  %s424, 128, %s426, %s414
        $region60: #{tpu_custom_call.1} parent=55 // pred_fallthru
          _
        // Predicated region
        $region61: #{tpu_custom_call.1} parent=55 // pred_check
          %p429 = pneg %p75
        $region62: #{tpu_custom_call.1} parent=55 // pred_check_branch
          %431 = sbr.rel (%p429) target = $region64
        $region63: #{tpu_custom_call.1} parent=55 // pred_region
          %s432 = sand.u32 %s29, 1
          %s433 = scalar_lea.sflag [#allocation6], %s432
          %s434 = sand.u32 %s65, 1
          %s435 = smul.addr %s434, 8
          %s436 = scalar_lea.vmem [#allocation5], %s435
          %438 = vsyncadd %s433, 0
          %s439 = smul.addr %s29, 8
          %s440 = scalar_lea.hbm %s1, %s439
          %s442 = sshll.u32 %s440, 4
          %s443 = int_to_ptr.hbm [resolvable:$true] %s442
          %s444 = sshll.u32 %s436, 4
          %s445 = int_to_ptr.vmem [resolvable:$true] %s444
          %447 = dma.hbm_to_vmem [thread:$0]  %s443, 128, %s445, %s433
        $region64: #{tpu_custom_call.1} parent=55 // pred_fallthru
          _
      $region56: #{tpu_custom_call.1} parent=5 // pred_fallthru
        _
      %p448 = scmp.le.s32.totalorder 1, %s29
      %p449 = scmp.lt.s32.totalorder %s29, 3
      %p450 = pnand %p448, %p449
      %p451 = pneg %p450
      // Predicated region
      $region65: #{tpu_custom_call.1} parent=5 // pred_check
        _
      $region66: #{tpu_custom_call.1} parent=5 // pred_check_branch
        %453 = sbr.rel (%p450) target = $region68
      $region67: #{tpu_custom_call.1} parent=5 // pred_region
        %s454 = ssub.s32 %s29, 1
        %s455 = sand.u32 %s42, 1
        %s456 = scalar_lea.sflag [#allocation3], %s455
        %s457 = sand.u32 %s42, 1
        %s458 = smul.addr %s457, 8
        %s459 = scalar_lea.vmem [#allocation2], %s458
        // Predicated region
        $region69: #{tpu_custom_call.1} parent=67 // pred_check
          %p460 = pneg %p55
        $region70: #{tpu_custom_call.1} parent=67 // pred_check_branch
          %462 = sbr.rel (%p460) target = $region72
        $region71: #{tpu_custom_call.1} parent=67 // pred_region
          %464 = dma.done %s456, 128
        $region72: #{tpu_custom_call.1} parent=67 // pred_fallthru
          _
        %s465 = sand.u32 %s34, 1
        %s466 = scalar_lea.sflag [#allocation6], %s465
        %s467 = sand.u32 %s68, 1
        %s468 = smul.addr %s467, 8
        %s469 = scalar_lea.vmem [#allocation5], %s468
        // Predicated region
        $region73: #{tpu_custom_call.1} parent=67 // pred_check
          %p470 = pneg %p81
        $region74: #{tpu_custom_call.1} parent=67 // pred_check_branch
          %472 = sbr.rel (%p470) target = $region76
        $region75: #{tpu_custom_call.1} parent=67 // pred_region
          %474 = dma.done %s466, 128
        $region76: #{tpu_custom_call.1} parent=67 // pred_fallthru
          _
        // Predicated region
        $region77: #{tpu_custom_call.1} parent=67 // pred_check
          %p475 = pneg %p102
        $region78: #{tpu_custom_call.1} parent=67 // pred_check_branch
          %477 = sbr.rel (%p475) target = $region80
        $region79: #{tpu_custom_call.1} parent=67 // pred_region
          %479 = dma.done [#allocation6], 256
        $region80: #{tpu_custom_call.1} parent=67 // pred_fallthru
          _
        // Predicated region
        $region81: #{tpu_custom_call.1} parent=67 // pred_check
          %p480 = pneg %p144
        $region82: #{tpu_custom_call.1} parent=67 // pred_check_branch
          %482 = sbr.rel (%p480) target = $region84
        $region83: #{tpu_custom_call.1} parent=67 // pred_region
          %484 = dma.done [#allocation9], 256
        $region84: #{tpu_custom_call.1} parent=67 // pred_fallthru
          _
        // Predicated region
        $region85: #{tpu_custom_call.1} parent=67 // pred_check
          %p485 = pneg %p186
        $region86: #{tpu_custom_call.1} parent=67 // pred_check_branch
          %487 = sbr.rel (%p485) target = $region88
        $region87: #{tpu_custom_call.1} parent=67 // pred_region
          %489 = dma.done [#allocation9], 256
        $region88: #{tpu_custom_call.1} parent=67 // pred_fallthru
          _
        // Predicated region
        $region89: #{tpu_custom_call.1} parent=67 // pred_check
          %p490 = pneg %p228
        $region90: #{tpu_custom_call.1} parent=67 // pred_check_branch
          %492 = sbr.rel (%p490) target = $region92
        $region91: #{tpu_custom_call.1} parent=67 // pred_region
          %494 = dma.done [#allocation12], 256
        $region92: #{tpu_custom_call.1} parent=67 // pred_fallthru
          _
        %s495 = sand.u32 %s42, 1
        %s496 = scalar_lea.sflag [#allocation3], %s495
        %s497 = sand.u32 %s42, 1
        %s498 = smul.addr %s497, 8
        %s499 = scalar_lea.vmem [#allocation2], %s498
        %p500 = pneg %p55
        %p501 = pneg %p52
        %s502 = sand.u32 %s34, 1
        %s503 = scalar_lea.sflag [#allocation6], %s502
        %s504 = sand.u32 %s68, 1
        %s505 = smul.addr %s504, 8
        %s506 = scalar_lea.vmem [#allocation5], %s505
        %p507 = pneg %p81
        %p508 = pneg %p78
        %p509 = pneg %p102
        %p510 = pneg %p99
        %p511 = pneg %p123
        %p512 = pneg %p120
        %p513 = pneg %p144
        %p514 = pneg %p141
        %p515 = pneg %p165
        %p516 = pneg %p162
        %p517 = pneg %p186
        %p518 = pneg %p183
        %p519 = pneg %p207
        %p520 = pneg %p204
        %p521 = pneg %p228
        %p522 = pneg %p225
        %p523 = pneg %p249
        %p524 = pneg %p246
        %p525 = pneg %p270
        %p526 = pneg %p267
        %p527 = pneg %p291
        %p528 = pneg %p288
        %p529 = pneg %p317
        %p530 = pneg %p314
        %s531 = sand.u32 %s304, 1
        %s532 = scalar_lea.sflag [#allocation4], %s531
        %s533 = sand.u32 %s304, 1
        %s534 = smul.addr %s533, 8
        %s535 = scalar_lea.vmem [#allocation13], %s534
        %v537 = vld [vmem:[%s459] sm:$0xff]
        %v538 = vld [vmem:[%s469] sm:$0xff]
        %v539 = vpack.c.bf16 %v537, %v537
        %v540 = vpack.c.bf16 %v538, %v538
        %v541 = vld [vmem:[#allocation7] sm:$0xf]
        %v542 = vld [vmem:[#allocation7 + $0x4] sm:$0xf]
        %v543 = vld [vmem:[#allocation7 + $0x8] sm:$0xf]
        %v544 = vld [vmem:[#allocation7 + $0xc] sm:$0xf]
        %v545 = vld [vmem:[%s3] sm:$0x1]
        %v547 = vperm.slane %v545, 0
        %v553 = vunpack.c.l.b16 %v541
        %v554 = vunpack.c.l.b16 %v542
        %v555 = vunpack.c.l.b16 %v543
        %v556 = vunpack.c.l.b16 %v544
        %v557 = vpack.c.b16 %v554, %v553
        %v558 = vpack.c.b16 %v556, %v555
        %vm561 = vcmask 261120
        %v563 = vsel %vm561, %v539, 0
        %565 = vmatpush.bf16.msra.mxu0 0
        %566 = vmatpush.bf16.msra.mxu0 0
        %567 = vmatpush.bf16.msra.mxu0 0
        %568 = vmatpush.bf16.msra.mxu0 0
        %569 = vmatpush.bf16.msra.mxu0 0
        %570 = vmatpush.bf16.msra.mxu0 0
        %571 = vmatpush.bf16.msra.mxu0 %v558
        %572 = vmatpush.bf16.msra.mxu0 %v557
        %573 = vmatmul.bf16.gmra.mxu0 %v563
        %v574 = vpop.f32.mrf.mxu0
        %v575 = vadd.f32 %v547, %v574
        %v576 = vpop.f32.mrf.mxu0
        %577 = vdwg.mxu0
        %v578 = vld [vmem:[#allocation8] sm:$0xf]
        %v579 = vld [vmem:[#allocation8 + $0x4] sm:$0xf]
        %v580 = vld [vmem:[#allocation8 + $0x8] sm:$0xf]
        %v581 = vld [vmem:[#allocation8 + $0xc] sm:$0xf]
        %v582 = vld [vmem:[%s5] sm:$0x1]
        %v584 = vperm.slane %v582, 0
        %v590 = vunpack.c.l.b16 %v578
        %v591 = vunpack.c.l.b16 %v579
        %v592 = vunpack.c.l.b16 %v580
        %v593 = vunpack.c.l.b16 %v581
        %v594 = vpack.c.b16 %v591, %v590
        %v595 = vpack.c.b16 %v593, %v592
        %v599 = vsel %vm561, %v540, 0
        %601 = vmatpush.bf16.msra.mxu0 0
        %602 = vmatpush.bf16.msra.mxu0 0
        %603 = vmatpush.bf16.msra.mxu0 0
        %604 = vmatpush.bf16.msra.mxu0 0
        %605 = vmatpush.bf16.msra.mxu0 0
        %606 = vmatpush.bf16.msra.mxu0 0
        %607 = vmatpush.bf16.msra.mxu0 %v595
        %608 = vmatpush.bf16.msra.mxu0 %v594
        %609 = vmatmul.bf16.gmra.mxu0 %v599
        %v610 = vpop.f32.mrf.mxu0
        %v611 = vadd.f32 %v584, %v610
        %v612 = vpop.f32.mrf.mxu0
        %613 = vdwg.mxu0
        %v614 = vld [vmem:[#allocation10] sm:$0xf]
        %v615 = vld [vmem:[#allocation10 + $0x4] sm:$0xf]
        %v616 = vld [vmem:[#allocation10 + $0x8] sm:$0xf]
        %v617 = vld [vmem:[#allocation10 + $0xc] sm:$0xf]
        %v618 = vld [vmem:[%s7] sm:$0x1]
        %v620 = vperm.slane %v618, 0
        %v626 = vunpack.c.l.b16 %v614
        %v627 = vunpack.c.l.b16 %v615
        %v628 = vunpack.c.l.b16 %v616
        %v629 = vunpack.c.l.b16 %v617
        %v630 = vpack.c.b16 %v627, %v626
        %v631 = vpack.c.b16 %v629, %v628
        %634 = vmatpush.bf16.msra.mxu0 0
        %635 = vmatpush.bf16.msra.mxu0 0
        %636 = vmatpush.bf16.msra.mxu0 0
        %637 = vmatpush.bf16.msra.mxu0 0
        %638 = vmatpush.bf16.msra.mxu0 0
        %639 = vmatpush.bf16.msra.mxu0 0
        %640 = vmatpush.bf16.msra.mxu0 %v631
        %641 = vmatpush.bf16.msra.mxu0 %v630
        %642 = vmatmul.bf16.gmra.mxu0 %v599
        %v643 = vpop.f32.mrf.mxu0
        %v644 = vadd.f32 %v620, %v643
        %v645 = vpop.f32.mrf.mxu0
        %646 = vdwg.mxu0
        %v647 = vmul.f32 %v575, 0.35355338
        %v648 = vpack.c.bf16 %v647, %v647
        %v649 = vpack.c.bf16 %v611, %v611
        %v650 = vpack.c.bf16 %v644, %v644
        %v651 = vld [vmem:[#allocation11] sm:$0xf]
        %v652 = vld [vmem:[#allocation11 + $0x4] sm:$0xf]
        %v653 = vld [vmem:[#allocation11 + $0x8] sm:$0xf]
        %v654 = vld [vmem:[#allocation11 + $0xc] sm:$0xf]
        %vm655 = vcmask 64512
        %v657 = vsel %vm655, %v648, 0
        %v660 = vsel %vm655, %v649, 0
        %662 = vmatpush.bf16.xpose.msra.mxu0 0
        %663 = vmatpush.bf16.xpose.msra.mxu0 0
        %664 = vmatpush.bf16.xpose.msra.mxu0 0
        %665 = vmatpush.bf16.xpose.msra.mxu0 0
        %666 = vmatpush.bf16.xpose.msra.mxu0 0
        %667 = vmatpush.bf16.xpose.msra.mxu0 0
        %668 = vmatpush.bf16.xpose.msra.mxu0 0
        %669 = vmatpush.bf16.xpose.msra.mxu0 %v660
        %670 = vmatmul.bf16.gmra.mxu0 %v657
        %v671 = vpop.f32.mrf.mxu0
        %v672 = vadd.f32 0.0, %v671
        %v673 = vpop.f32.mrf.mxu0
        %674 = vdwg.mxu0
        %v675 = vsel %vm655, %v672, -inf
        %676 = vmax.xlane.f32.xlu0 %v675
        %v677 = vpop.xlane.xlu0 %676
        %v678 = vsub.f32 %v672, %v677
        %v679 = vmul.f32 %v678, 1.442695
        %v680 = vpow.pop %v679
        %v681 = vsel %vm655, %v680, 0.0
        %682 = vadd.xlane.f32.xlu0 %v681
        %v683 = vpop.xlane.xlu0 %682
        %v684 = vrcp.pop %v683
        %v685 = vmul.f32 %v680, %v684
        %v686 = vpack.c.bf16 %v685, %v685
        %v688 = vsel %vm655, %v686, 0
        %vm690 = vcmask 1043456
        %v692 = vsel %vm690, %v650, 0
        %694 = vmatpush.bf16.msra.mxu0 0
        %695 = vmatpush.bf16.msra.mxu0 0
        %696 = vmatpush.bf16.msra.mxu0 0
        %697 = vmatpush.bf16.msra.mxu0 0
        %698 = vmatpush.bf16.msra.mxu0 0
        %699 = vmatpush.bf16.msra.mxu0 0
        %700 = vmatpush.bf16.msra.mxu0 0
        %701 = vmatpush.bf16.msra.mxu0 %v692
        %702 = vmatmul.bf16.gmra.mxu0 %v688
        %v703 = vpop.f32.mrf.mxu0
        %v704 = vadd.f32 0.0, %v703
        %v705 = vpop.f32.mrf.mxu0
        %706 = vdwg.mxu0
        %v707 = vpack.c.bf16 %v704, %v704
        %v709 = vunpack.c.l.b16 %v648
        %v710 = vpack.c.b16 %v709, %v709
        %711 = vrot.lane.b32.xlu0 %v710, 120
        %v712 = vpop.permute.xlu0 %711
        %v714 = vunpack.c.l.b16 %v649
        %v715 = vpack.c.b16 %v714, %v714
        %716 = vrot.lane.b32.xlu0 %v715, 120
        %v717 = vpop.permute.xlu0 %716
        %v719 = vsel %vm655, %v712, 0
        %v722 = vsel %vm655, %v717, 0
        %724 = vmatpush.bf16.xpose.msra.mxu0 0
        %725 = vmatpush.bf16.xpose.msra.mxu0 0
        %726 = vmatpush.bf16.xpose.msra.mxu0 0
        %727 = vmatpush.bf16.xpose.msra.mxu0 0
        %728 = vmatpush.bf16.xpose.msra.mxu0 0
        %729 = vmatpush.bf16.xpose.msra.mxu0 0
        %730 = vmatpush.bf16.xpose.msra.mxu0 0
        %731 = vmatpush.bf16.xpose.msra.mxu0 %v722
        %732 = vmatmul.bf16.gmra.mxu0 %v719
        %v733 = vpop.f32.mrf.mxu0
        %v734 = vadd.f32 0.0, %v733
        %v735 = vpop.f32.mrf.mxu0
        %736 = vdwg.mxu0
        %v737 = vsel %vm655, %v734, -inf
        %738 = vmax.xlane.f32.xlu0 %v737
        %v739 = vpop.xlane.xlu0 %738
        %v740 = vsub.f32 %v734, %v739
        %v741 = vmul.f32 %v740, 1.442695
        %v742 = vpow.pop %v741
        %v743 = vsel %vm655, %v742, 0.0
        %744 = vadd.xlane.f32.xlu0 %v743
        %v745 = vpop.xlane.xlu0 %744
        %v746 = vrcp.pop %v745
        %v747 = vmul.f32 %v742, %v746
        %v748 = vpack.c.bf16 %v747, %v747
        %v750 = vunpack.c.l.b16 %v650
        %v751 = vpack.c.b16 %v750, %v750
        %752 = vrot.lane.b32.xlu0 %v751, 120
        %v753 = vpop.permute.xlu0 %752
        %v755 = vsel %vm655, %v748, 0
        %v758 = vsel %vm690, %v753, 0
        %760 = vmatpush.bf16.msra.mxu0 0
        %761 = vmatpush.bf16.msra.mxu0 0
        %762 = vmatpush.bf16.msra.mxu0 0
        %763 = vmatpush.bf16.msra.mxu0 0
        %764 = vmatpush.bf16.msra.mxu0 0
        %765 = vmatpush.bf16.msra.mxu0 0
        %766 = vmatpush.bf16.msra.mxu0 0
        %767 = vmatpush.bf16.msra.mxu0 %v758
        %768 = vmatmul.bf16.gmra.mxu0 %v755
        %v769 = vpop.f32.mrf.mxu0
        %v770 = vadd.f32 0.0, %v769
        %v771 = vpop.f32.mrf.mxu0
        %772 = vdwg.mxu0
        %v773 = vpack.c.bf16 %v770, %v770
        %v775 = vsel %vm655, %v773, 0
        %v778 = vsel %vm690, %v652, 0
        %780 = vmatpush.bf16.msra.mxu0 0
        %781 = vmatpush.bf16.msra.mxu0 0
        %782 = vmatpush.bf16.msra.mxu0 0
        %783 = vmatpush.bf16.msra.mxu0 0
        %784 = vmatpush.bf16.msra.mxu0 0
        %785 = vmatpush.bf16.msra.mxu0 0
        %786 = vmatpush.bf16.msra.mxu0 0
        %787 = vmatpush.bf16.msra.mxu0 %v778
        %788 = vmatmul.bf16.gmra.mxu0 %v775
        %v789 = vpop.f32.mrf.mxu0
        %v790 = vadd.f32 0.0, %v789
        %v791 = vpop.f32.mrf.mxu0
        %792 = vdwg.mxu0
        %v794 = vsel %vm655, %v707, 0
        %v797 = vsel %vm690, %v651, 0
        %799 = vmatpush.bf16.msra.mxu0 0
        %800 = vmatpush.bf16.msra.mxu0 0
        %801 = vmatpush.bf16.msra.mxu0 0
        %802 = vmatpush.bf16.msra.mxu0 0
        %803 = vmatpush.bf16.msra.mxu0 0
        %804 = vmatpush.bf16.msra.mxu0 0
        %805 = vmatpush.bf16.msra.mxu0 0
        %806 = vmatpush.bf16.msra.mxu0 %v797
        %807 = vmatmul.bf16.gmra.mxu0 %v794
        %v808 = vpop.f32.mrf.mxu0
        %v809 = vadd.f32 %v790, %v808
        %v810 = vpop.f32.mrf.mxu0
        %811 = vdwg.mxu0
        %812 = vrot.lane.b32.xlu0 %v710, 112
        %v813 = vpop.permute.xlu0 %812
        %814 = vrot.lane.b32.xlu0 %v715, 112
        %v815 = vpop.permute.xlu0 %814
        %v817 = vsel %vm655, %v813, 0
        %v820 = vsel %vm655, %v815, 0
        %822 = vmatpush.bf16.xpose.msra.mxu0 0
        %823 = vmatpush.bf16.xpose.msra.mxu0 0
        %824 = vmatpush.bf16.xpose.msra.mxu0 0
        %825 = vmatpush.bf16.xpose.msra.mxu0 0
        %826 = vmatpush.bf16.xpose.msra.mxu0 0
        %827 = vmatpush.bf16.xpose.msra.mxu0 0
        %828 = vmatpush.bf16.xpose.msra.mxu0 0
        %829 = vmatpush.bf16.xpose.msra.mxu0 %v820
        %830 = vmatmul.bf16.gmra.mxu0 %v817
        %v831 = vpop.f32.mrf.mxu0
        %v832 = vadd.f32 0.0, %v831
        %v833 = vpop.f32.mrf.mxu0
        %834 = vdwg.mxu0
        %v835 = vsel %vm655, %v832, -inf
        %836 = vmax.xlane.f32.xlu0 %v835
        %v837 = vpop.xlane.xlu0 %836
        %v838 = vsub.f32 %v832, %v837
        %v839 = vmul.f32 %v838, 1.442695
        %v840 = vpow.pop %v839
        %v841 = vsel %vm655, %v840, 0.0
        %842 = vadd.xlane.f32.xlu0 %v841
        %v843 = vpop.xlane.xlu0 %842
        %v844 = vrcp.pop %v843
        %v845 = vmul.f32 %v840, %v844
        %v846 = vpack.c.bf16 %v845, %v845
        %847 = vrot.lane.b32.xlu0 %v751, 112
        %v848 = vpop.permute.xlu0 %847
        %v850 = vsel %vm655, %v846, 0
        %v853 = vsel %vm690, %v848, 0
        %855 = vmatpush.bf16.msra.mxu0 0
        %856 = vmatpush.bf16.msra.mxu0 0
        %857 = vmatpush.bf16.msra.mxu0 0
        %858 = vmatpush.bf16.msra.mxu0 0
        %859 = vmatpush.bf16.msra.mxu0 0
        %860 = vmatpush.bf16.msra.mxu0 0
        %861 = vmatpush.bf16.msra.mxu0 0
        %862 = vmatpush.bf16.msra.mxu0 %v853
        %863 = vmatmul.bf16.gmra.mxu0 %v850
        %v864 = vpop.f32.mrf.mxu0
        %v865 = vadd.f32 0.0, %v864
        %v866 = vpop.f32.mrf.mxu0
        %867 = vdwg.mxu0
        %v868 = vpack.c.bf16 %v865, %v865
        %v870 = vsel %vm655, %v868, 0
        %v873 = vsel %vm690, %v653, 0
        %875 = vmatpush.bf16.msra.mxu0 0
        %876 = vmatpush.bf16.msra.mxu0 0
        %877 = vmatpush.bf16.msra.mxu0 0
        %878 = vmatpush.bf16.msra.mxu0 0
        %879 = vmatpush.bf16.msra.mxu0 0
        %880 = vmatpush.bf16.msra.mxu0 0
        %881 = vmatpush.bf16.msra.mxu0 0
        %882 = vmatpush.bf16.msra.mxu0 %v873
        %883 = vmatmul.bf16.gmra.mxu0 %v870
        %v884 = vpop.f32.mrf.mxu0
        %v885 = vadd.f32 0.0, %v884
        %v886 = vpop.f32.mrf.mxu0
        %887 = vdwg.mxu0
        %v888 = vadd.f32 %v809, %v885
        %889 = vrot.lane.b32.xlu0 %v710, 104
        %v890 = vpop.permute.xlu0 %889
        %891 = vrot.lane.b32.xlu0 %v715, 104
        %v892 = vpop.permute.xlu0 %891
        %v894 = vsel %vm655, %v890, 0
        %v897 = vsel %vm655, %v892, 0
        %899 = vmatpush.bf16.xpose.msra.mxu0 0
        %900 = vmatpush.bf16.xpose.msra.mxu0 0
        %901 = vmatpush.bf16.xpose.msra.mxu0 0
        %902 = vmatpush.bf16.xpose.msra.mxu0 0
        %903 = vmatpush.bf16.xpose.msra.mxu0 0
        %904 = vmatpush.bf16.xpose.msra.mxu0 0
        %905 = vmatpush.bf16.xpose.msra.mxu0 0
        %906 = vmatpush.bf16.xpose.msra.mxu0 %v897
        %907 = vmatmul.bf16.gmra.mxu0 %v894
        %v908 = vpop.f32.mrf.mxu0
        %v909 = vadd.f32 0.0, %v908
        %v910 = vpop.f32.mrf.mxu0
        %911 = vdwg.mxu0
        %v912 = vsel %vm655, %v909, -inf
        %913 = vmax.xlane.f32.xlu0 %v912
        %v914 = vpop.xlane.xlu0 %913
        %v915 = vsub.f32 %v909, %v914
        %v916 = vmul.f32 %v915, 1.442695
        %v917 = vpow.pop %v916
        %v918 = vsel %vm655, %v917, 0.0
        %919 = vadd.xlane.f32.xlu0 %v918
        %v920 = vpop.xlane.xlu0 %919
        %v921 = vrcp.pop %v920
        %v922 = vmul.f32 %v917, %v921
        %v923 = vpack.c.bf16 %v922, %v922
        %924 = vrot.lane.b32.xlu0 %v751, 104
        %v925 = vpop.permute.xlu0 %924
        %v927 = vsel %vm655, %v923, 0
        %v930 = vsel %vm690, %v925, 0
        %932 = vmatpush.bf16.msra.mxu0 0
        %933 = vmatpush.bf16.msra.mxu0 0
        %934 = vmatpush.bf16.msra.mxu0 0
        %935 = vmatpush.bf16.msra.mxu0 0
        %936 = vmatpush.bf16.msra.mxu0 0
        %937 = vmatpush.bf16.msra.mxu0 0
        %938 = vmatpush.bf16.msra.mxu0 0
        %939 = vmatpush.bf16.msra.mxu0 %v930
        %940 = vmatmul.bf16.gmra.mxu0 %v927
        %v941 = vpop.f32.mrf.mxu0
        %v942 = vadd.f32 0.0, %v941
        %v943 = vpop.f32.mrf.mxu0
        %944 = vdwg.mxu0
        %v945 = vpack.c.bf16 %v942, %v942
        %v947 = vsel %vm655, %v945, 0
        %v950 = vsel %vm690, %v654, 0
        %952 = vmatpush.bf16.msra.mxu0 0
        %953 = vmatpush.bf16.msra.mxu0 0
        %954 = vmatpush.bf16.msra.mxu0 0
        %955 = vmatpush.bf16.msra.mxu0 0
        %956 = vmatpush.bf16.msra.mxu0 0
        %957 = vmatpush.bf16.msra.mxu0 0
        %958 = vmatpush.bf16.msra.mxu0 0
        %959 = vmatpush.bf16.msra.mxu0 %v950
        %960 = vmatmul.bf16.gmra.mxu0 %v947
        %v961 = vpop.f32.mrf.mxu0
        %v962 = vadd.f32 0.0, %v961
        %v963 = vpop.f32.mrf.mxu0
        %964 = vdwg.mxu0
        %v965 = vadd.f32 %v888, %v962
        %v966 = vadd.f32 %v537, %v965
        %v967 = vld [vmem:[%s9] sm:$0x1]
        %v969 = vperm.slane %v967, 0
        %v971 = vadd.f32 %v966, %v969
        %v972 = vsel %vm561, %v971, 0.0
        %973 = vadd.xlane.f32.xlu0 %v972
        %v974 = vpop.xlane.xlu0 %973
        %v975 = vrcp.pop 32.0
        %v976 = vmul.f32 32.0, %v975
        %v977 = vsub.f32 1.0, %v976
        %v978 = vmul.f32 %v975, %v977
        %v979 = vadd.f32 %v975, %v978
        %vm980 = vweird.f32 %v975
        %v981 = vsel %vm980, %v975, %v979
        %v982 = vmul.f32 %v974, %v981
        %v983 = vsub.f32 %v971, %v982
        %v984 = vmul.f32 %v983, %v983
        %v985 = vsel %vm561, %v984, 0.0
        %986 = vadd.xlane.f32.xlu0 %v985
        %v987 = vpop.xlane.xlu0 %986
        %v988 = vmul.f32 %v987, %v981
        %v989 = vadd.f32 %v988, 1e-12
        %v990 = vrsqrt.pop %v989
        %v991 = vmul.f32 %v990, %v989
        %v992 = vmul.f32 %v991, %v990
        %v993 = vmul.f32 0.5, %v992
        %v994 = vsub.f32 1.5, %v993
        %v995 = vmul.f32 %v990, %v994
        %vm996 = vweird.f32 %v989
        %vm997 = vweird.f32 %v990
        %vm998 = vmor %vm996, %vm997
        %v999 = vsel %vm998, %v990, %v995
        %v1000 = vmul.f32 %v983, %v999
        %v1001 = vld [vmem:[%s10] sm:$0x1]
        %v1003 = vperm.slane %v1001, 0
        %v1005 = vmul.f32 %v1000, %v1003
        %v1006 = vld [vmem:[%s11] sm:$0x1]
        %v1008 = vperm.slane %v1006, 0
        %v1010 = vadd.f32 %v1005, %v1008
        %1011 = vst.msk [vmem:[%s535] sm:$0xff] %vm561, %v1010
        %s1012 = sand.u32 %s304, 1
        %s1013 = scalar_lea.sflag [#allocation4], %s1012
        %s1014 = sand.u32 %s304, 1
        %s1015 = smul.addr %s1014, 8
        %s1016 = scalar_lea.vmem [#allocation13], %s1015
        // Predicated region
        $region93: #{tpu_custom_call.1} parent=67 // pred_check
          %p1017 = pneg %p314
        $region94: #{tpu_custom_call.1} parent=67 // pred_check_branch
          %1019 = sbr.rel (%p1017) target = $region96
        $region95: #{tpu_custom_call.1} parent=67 // pred_region
          %1021 = vsyncadd %s1013, 0
          %s1022 = smul.addr %s34, 8
          %s1023 = scalar_lea.hbm %s12, %s1022
          %s1025 = sshll.u32 %s1016, 4
          %s1026 = int_to_ptr.vmem [resolvable:$true] %s1025
          %s1027 = sshll.u32 %s1023, 4
          %s1028 = int_to_ptr.hbm [resolvable:$true] %s1027
          %1030 = dma.vmem_to_hbm [thread:$0]  %s1026, 128, %s1028, %s1013
        $region96: #{tpu_custom_call.1} parent=67 // pred_fallthru
          _
      $region68: #{tpu_custom_call.1} parent=5 // pred_fallthru
        _
      %p1031 = scmp.le.s32.totalorder 2, %s29
      // Predicated region
      $region97: #{tpu_custom_call.1} parent=5 // pred_check
        %p1032 = pneg %p1031
      $region98: #{tpu_custom_call.1} parent=5 // pred_check_branch
        %1034 = sbr.rel (%p1032) target = $region100
      $region99: #{tpu_custom_call.1} parent=5 // pred_region
        %s1035 = ssub.s32 %s29, 2
        // Predicated region
        $region101: #{tpu_custom_call.1} parent=99 // pred_check
          %p1036 = pneg %p320
        $region102: #{tpu_custom_call.1} parent=99 // pred_check_branch
          %1038 = sbr.rel (%p1036) target = $region104
        $region103: #{tpu_custom_call.1} parent=99 // pred_region
          %s1039 = sand.u32 %s305, 1
          %s1040 = scalar_lea.sflag [#allocation4], %s1039
          %s1041 = sand.u32 %s305, 1
          %s1042 = smul.addr %s1041, 8
          %s1043 = scalar_lea.vmem [#allocation13], %s1042
          %1045 = dma.done %s1040, 128
        $region104: #{tpu_custom_call.1} parent=99 // pred_fallthru
          _
      $region100: #{tpu_custom_call.1} parent=5 // pred_fallthru
        _
    $region6: #{tpu_custom_call.1} parent=1 // loop_footer
      %s33 = sadd.s32 1, %s29
    $region7: #{tpu_custom_call.1} parent=1 // loop_footer_branch
      %28 = sbr.rel target = $region3
    $region8: #{tpu_custom_call.1} parent=1 // loop_exit
      _
    %1046 = vsyncpa [#allocation3], 1
    %s1047 = scalar_lea.sflag [#allocation3], 1
    %1048 = vsyncpa %s1047, 1
    %1049 = vsyncpa [#allocation6], 1
    %s1050 = scalar_lea.sflag [#allocation6], 1
    %1051 = vsyncpa %s1050, 1
    %1052 = vsyncpa [#allocation9], 1
    %1053 = vsyncpa [#allocation12], 1
    %1054 = vsyncpa [#allocation4], 1
    %s1055 = scalar_lea.sflag [#allocation4], 1
    %1056 = vsyncpa %s1055, 1

</llo_original>
